<compile_context>
chip_gen: v7x
topology: tpu7x:2x2x1
jax: 0.10.0
libtpu: 0.0.40
codegen_flags: <defaults>
</compile_context>

<pallas_src>
import functools
import math

import jax
import jax.numpy as jnp
from jax.experimental import pallas as pl
from jax.experimental.pallas import tpu as pltpu


_VMEM_LIMIT = 48 * 1024 * 1024   # below v7x's 64 MiB physical, fine on v5e/v6e
_SCORE_ROW_TILE = 512            # rows/block for the mem-bound score kernel
_MM_ROW_TILE = 256               # rows/block for the matmul kernels (256-class MXU)


# ----------------------------------------------------------------------------
# Small helpers
# ----------------------------------------------------------------------------
def _round_up(v, m):
    return ((v + m - 1) // m) * m


def _row_tiling(n_rows, target):
    """Row-tile size (multiple of 8) and padded row count."""
    if n_rows <= target:
        tm = max(8, _round_up(n_rows, 8))
        return tm, tm
    return target, _round_up(n_rows, target)


def _pad_rows(a, padded_rows):
    r = a.shape[0]
    if padded_rows == r:
        return a
    pad = [(0, padded_rows - r)] + [(0, 0)] * (a.ndim - 1)
    return jnp.pad(a, pad)


def _const_spec(a):
    """Whole-array block with a constant index map (weights / LN params)."""
    nd = a.ndim
    return pl.BlockSpec(a.shape, lambda i, _nd=nd: (0,) * _nd)


def _cparams(*semantics):
    return pltpu.CompilerParams(dimension_semantics=semantics,
                                vmem_limit_bytes=_VMEM_LIMIT)


def _layernorm(x, gamma, beta, eps=1e-5):
    # TODO(synk): reference LayerNorm class not provided; nn.LayerNorm default eps=1e-5 assumed.
    mean = jnp.mean(x, axis=-1, keepdims=True)
    var = jnp.mean(jnp.square(x - mean), axis=-1, keepdims=True)
    return (x - mean) * jax.lax.rsqrt(var + eps) * gamma + beta


# ----------------------------------------------------------------------------
# Kernel 1: projection score  y = x @ p / ||p||   (row-tiled, lane-dense output)
# ----------------------------------------------------------------------------
def _score_kernel(x_ref, p_ref, y_ref):
    # x: (tm, H), p: (1, H) already normalized -> lane-dense (1, tm) result.
    y_ref[0] = jax.lax.dot_general(
        p_ref[...], x_ref[...], (((1,), (1,)), ((), ())),
        preferred_element_type=jnp.float32)


def score_matvec(x, p):
    B, N, H = x.shape
    R = B * N
    tm, Rp = _row_tiling(R, _SCORE_ROW_TILE)
    x2 = _pad_rows(x.reshape(R, H).astype(jnp.float32), Rp)
    p_n = (p / jnp.linalg.norm(p)).astype(jnp.float32).reshape(1, H)
    n_tiles = Rp // tm
    y = pl.pallas_call(
        _score_kernel,
        grid=(n_tiles,),
        out_shape=jax.ShapeDtypeStruct((n_tiles, 1, tm), jnp.float32),
        in_specs=[pl.BlockSpec((tm, H), lambda i: (i, 0)),
                  pl.BlockSpec((1, H), lambda i: (0, 0))],
        out_specs=pl.BlockSpec((1, 1, tm), lambda i: (i, 0, 0)),
        compiler_params=_cparams("parallel"),
    )(x2, p_n)
    return y.reshape(Rp)[:R].reshape(B, N)


# ----------------------------------------------------------------------------
# On-device index selection (replaces host round-trip dict counting)
# ----------------------------------------------------------------------------
def select_indices(y, k):
    """argsort(desc) + most_frequent_indices, fully on device.

    For argsort output every node index appears exactly once per batch row, so
    counts all tie; the reference's stable sort over dict-insertion order then
    reduces to 'first k distinct indices in flattened scan order', which the
    (count desc, first-appearance asc) lexsort reproduces.
    """
    B, N = y.shape
    idx_sorted = jnp.argsort(-y, axis=1)                       # descending per row
    flat = idx_sorted.reshape(-1)
    pos = jnp.arange(B * N, dtype=jnp.int32)
    counts = jnp.zeros((N,), jnp.int32).at[flat].add(1)
    first_pos = jnp.full((N,), B * N, dtype=jnp.int32).at[flat].min(pos)
    order = jnp.argsort(first_pos)                             # first appearance
    order = order[jnp.argsort(-counts[order])]                 # stable: count desc
    return order[:k].astype(jnp.int32)


# ----------------------------------------------------------------------------
# Kernel 2: fused sigmoid-gate + LayerNorm + pre-LN1 + QKV projection
#           (flattened B*K rows, bf16 matmuls, f32 accumulation)
# ----------------------------------------------------------------------------
def _gate_norm_qkv_kernel(x_ref, y_ref, ng_ref, nb_ref, g1_ref, b1_ref,
                          wq_ref, bq_ref, wk_ref, bk_ref, wv_ref, bv_ref,
                          xg_ref, q_ref, k_ref, v_ref):
    x = x_ref[...].astype(jnp.float32)                                 # (tm, H)
    gate = jax.nn.sigmoid(y_ref[...].astype(jnp.float32))              # (tm, 1) f32
    xg = _layernorm(x * gate, ng_ref[...], nb_ref[...])                # f32 stats
    xg_ref[...] = xg.astype(xg_ref.dtype)
    xn = _layernorm(xg, g1_ref[...], b1_ref[...]).astype(jnp.bfloat16)
    q_ref[...] = (jnp.dot(xn, wq_ref[...], preferred_element_type=jnp.float32)
                  + bq_ref[...]).astype(q_ref.dtype)
    k_ref[...] = (jnp.dot(xn, wk_ref[...], preferred_element_type=jnp.float32)
                  + bk_ref[...]).astype(k_ref.dtype)
    v_ref[...] = (jnp.dot(xn, wv_ref[...], preferred_element_type=jnp.float32)
                  + bv_ref[...]).astype(v_ref.dtype)


def gate_norm_qkv(x_rows, y_rows, norm_g, norm_b, ln1_g, ln1_b,
                  wq, bq, wk, bk, wv, bv):
    R, H = x_rows.shape
    tm, Rp = _row_tiling(R, _MM_ROW_TILE)
    xp = _pad_rows(x_rows, Rp)
    yp = _pad_rows(y_rows, Rp)
    n_tiles = Rp // tm
    row_spec = pl.BlockSpec((tm, H), lambda i: (i, 0))
    gate_spec = pl.BlockSpec((tm, 1), lambda i: (i, 0))
    # weights / LN params: whole-array constant-index blocks.
    weights = [norm_g, norm_b, ln1_g, ln1_b, wq, bq, wk, bk, wv, bv]
    in_specs = [row_spec, gate_spec] + [_const_spec(w) for w in weights]
    out_spec = pl.BlockSpec((tm, H), lambda i: (i, 0))
    xg, q, k, v = pl.pallas_call(
        _gate_norm_qkv_kernel,
        grid=(n_tiles,),
        out_shape=(jax.ShapeDtypeStruct((Rp, H), jnp.float32),
                   jax.ShapeDtypeStruct((Rp, H), jnp.bfloat16),
                   jax.ShapeDtypeStruct((Rp, H), jnp.bfloat16),
                   jax.ShapeDtypeStruct((Rp, H), jnp.bfloat16)),
        in_specs=in_specs,
        out_specs=(out_spec, out_spec, out_spec, out_spec),
        compiler_params=_cparams("parallel"),
    )(xp, yp, *weights)
    return xg[:R], q[:R], k[:R], v[:R]


# ----------------------------------------------------------------------------
# Kernel 3: attention core (scores / softmax / PV), grid over (batch, head)
# ----------------------------------------------------------------------------
def _attention_kernel(q_ref, k_ref, v_ref, o_ref, *, scale):
    q = q_ref[0, 0]                                     # (S, hd) bf16
    k = k_ref[0, 0]
    v = v_ref[0, 0]
    s = jax.lax.dot_general(q, k, (((1,), (1,)), ((), ())),
                            preferred_element_type=jnp.float32) * scale
    p = jax.nn.softmax(s, axis=-1)                      # f32 softmax
    o = jnp.dot(p.astype(v.dtype), v, preferred_element_type=jnp.float32)
    o_ref[0, 0] = o.astype(o_ref.dtype)


def multihead_attention(q, k, v):
    """q, k, v: (B, n_heads, S, head_dim) bf16 -> (B, n_heads, S, head_dim) bf16."""
    B, nh, S, hd = q.shape
    kernel = functools.partial(_attention_kernel, scale=1.0 / math.sqrt(hd))
    spec = pl.BlockSpec((1, 1, S, hd), lambda b, h: (b, h, 0, 0))
    return pl.pallas_call(
        kernel,
        grid=(B, nh),
        out_shape=jax.ShapeDtypeStruct((B, nh, S, hd), jnp.bfloat16),
        in_specs=[spec, spec, spec],
        out_specs=spec,
        compiler_params=_cparams("parallel", "parallel"),
    )(q, k, v)


# ----------------------------------------------------------------------------
# Kernel 4: output projection + residual + pre-LN2 + FFN + residual
#           (flattened rows, bf16 matmuls, f32 accumulation / residuals)
# ----------------------------------------------------------------------------
def _outproj_ffn_kernel(attn_ref, xg_ref, wo_ref, bo_ref, g2_ref, b2_ref,
                        w1_ref, bf1_ref, w2_ref, bf2_ref, o_ref):
    x = xg_ref[...].astype(jnp.float32)                                # (tm, H)
    proj = jnp.dot(attn_ref[...], wo_ref[...],
                   preferred_element_type=jnp.float32) + bo_ref[...]
    x1 = x + proj                                                      # residual 1
    xn = _layernorm(x1, g2_ref[...], b2_ref[...]).astype(jnp.bfloat16)
    h = jnp.dot(xn, w1_ref[...], preferred_element_type=jnp.float32) + bf1_ref[...]
    h = jnp.maximum(h, 0.0).astype(jnp.bfloat16)
    ff = jnp.dot(h, w2_ref[...], preferred_element_type=jnp.float32) + bf2_ref[...]
    o_ref[...] = (x1 + ff).astype(o_ref.dtype)                         # residual 2


def outproj_ffn(attn_rows, xg_rows, wo, bo, ln2_g, ln2_b, w1, b1, w2, b2):
    R, H = attn_rows.shape
    tm, Rp = _row_tiling(R, _MM_ROW_TILE)
    ap = _pad_rows(attn_rows, Rp)
    xp = _pad_rows(xg_rows, Rp)
    n_tiles = Rp // tm
    weights = [wo, bo, ln2_g, ln2_b, w1, b1, w2, b2]
    in_specs = ([pl.BlockSpec((tm, H), lambda i: (i, 0)),
                 pl.BlockSpec((tm, H), lambda i: (i, 0))]
                + [_const_spec(w) for w in weights])
    out = pl.pallas_call(
        _outproj_ffn_kernel,
        grid=(n_tiles,),
        out_shape=jax.ShapeDtypeStruct((Rp, H), jnp.float32),
        in_specs=in_specs,
        out_specs=pl.BlockSpec((tm, H), lambda i: (i, 0)),
        compiler_params=_cparams("parallel"),
    )(ap, xp, *weights)
    return out[:R]


# ----------------------------------------------------------------------------
# Parameters + forward
# ----------------------------------------------------------------------------
def init_gpool_params(key, hidden_size, ff_size):
    H, F = hidden_size, ff_size
    ks = jax.random.split(key, 8)
    s_h = 1.0 / math.sqrt(H)
    s_f = 1.0 / math.sqrt(F)
    return {
        'p': jax.random.normal(ks[0], (H,), jnp.float32),
        'norm_g': jnp.ones((1, H), jnp.float32),
        'norm_b': jnp.zeros((1, H), jnp.float32),
        'ln1_g': jnp.ones((1, H), jnp.float32),
        'ln1_b': jnp.zeros((1, H), jnp.float32),
        'ln2_g': jnp.ones((1, H), jnp.float32),
        'ln2_b': jnp.zeros((1, H), jnp.float32),
        'wq': jax.random.normal(ks[1], (H, H), jnp.float32) * s_h,
        'bq': jnp.zeros((1, H), jnp.float32),
        'wk': jax.random.normal(ks[2], (H, H), jnp.float32) * s_h,
        'bk': jnp.zeros((1, H), jnp.float32),
        'wv': jax.random.normal(ks[3], (H, H), jnp.float32) * s_h,
        'bv': jnp.zeros((1, H), jnp.float32),
        'wo': jax.random.normal(ks[4], (H, H), jnp.float32) * s_h,
        'bo': jnp.zeros((1, H), jnp.float32),
        'w1': jax.random.normal(ks[5], (H, F), jnp.float32) * s_h,
        'b1': jnp.zeros((1, F), jnp.float32),
        'w2': jax.random.normal(ks[6], (F, H), jnp.float32) * s_f,
        'b2': jnp.zeros((1, H), jnp.float32),
    }


def gpool_forward(x, params, *, factor=4, n_heads=4):
    """gPool forward (dim=1, no_pe=True). Returns (x_pooled, num_nodes, idx)."""
    B, N, H = x.shape
    num_nodes = N
    K = N // factor
    hd = H // n_heads

    # 1) projection score (Pallas, row-tiled / pipelined).
    y = score_matvec(x, params['p'])                       # (B, N) f32

    # 2) index selection on device (no host round trip).
    idx = select_indices(y, K)                             # (K,) int32

    # 3) gather the selected nodes / scores (XLA gather glue), flatten rows.
    x_sel = jnp.take(x, idx, axis=1).reshape(B * K, H)
    y_sel = jnp.take(y, idx, axis=1).reshape(B * K, 1)

    # bf16 copies of the matmul weights (f32 accumulation inside the kernels).
    wq = params['wq'].astype(jnp.bfloat16)
    wk = params['wk'].astype(jnp.bfloat16)
    wv = params['wv'].astype(jnp.bfloat16)
    wo = params['wo'].astype(jnp.bfloat16)
    w1 = params['w1'].astype(jnp.bfloat16)
    w2 = params['w2'].astype(jnp.bfloat16)

    # 4) fused sigmoid gate + LayerNorm + pre-LN1 + QKV projection (Pallas).
    xg, q, k, v = gate_norm_qkv(
        x_sel, y_sel, params['norm_g'], params['norm_b'],
        params['ln1_g'], params['ln1_b'],
        wq, params['bq'], wk, params['bk'], wv, params['bv'])

    # 5) multi-head self-attention core (Pallas, grid over batch x heads).
    def to_heads(a):
        return a.reshape(B, K, n_heads, hd).transpose(0, 2, 1, 3)  # (B, nh, K, hd)
    attn = multihead_attention(to_heads(q), to_heads(k), to_heads(v))
    attn_rows = attn.transpose(0, 2, 1, 3).reshape(B * K, H)

    # 6) output projection + residual + pre-LN2 + FFN + residual (Pallas).
    out_rows = outproj_ffn(attn_rows, xg, wo, params['bo'],
                           params['ln2_g'], params['ln2_b'],
                           w1, params['b1'], w2, params['b2'])
    out = out_rows.reshape(B, K, H)

    # TODO(synk): PositionalEncoding / dropout paths not exercised (no_pe=True, eval mode).
    return out, num_nodes, idx


if __name__ == "__main__":
    B, N, H, F = 2, 16, 32, 64      # batch, nodes, hidden_size, ff_size
    factor, n_heads = 4, 4

    key = jax.random.PRNGKey(0)
    k_x, k_p = jax.random.split(key)
    x = jax.random.normal(k_x, (B, N, H), jnp.float32)
    params = init_gpool_params(k_p, H, F)

    fwd = jax.jit(functools.partial(gpool_forward, factor=factor, n_heads=n_heads))
    out, num_nodes, idx = fwd(x, params)
    out = jax.block_until_ready(out)
    idx = jax.block_until_ready(idx)

    assert out.shape == (B, N // factor, H)
    assert int(num_nodes) == N
    assert idx.shape == (N // factor,)
    print("KERNEL_OK")
</pallas_src>

<mosaic_0001>
module attributes {stable_mosaic.version = 11 : i64} {
  func.func private @main(%arg0: i32) attributes {dimension_semantics = [#tpu.dimension_semantics<core_parallel>], iteration_bounds = array<i64: 2>, tpu.core_type = #tpu.core_type<sc_scalar_subcore>, window_params = []} {
    return
  }
}

module attributes {stable_mosaic.version = 11 : i64} {
  func.func private @main(%arg0: i32) attributes {dimension_semantics = [#tpu.dimension_semantics<core_parallel>], iteration_bounds = array<i64: 2>, tpu.core_type = #tpu.core_type<sc_scalar_subcore>, window_params = []} {
    return
  }
}

module attributes {stable_mosaic.version = 11 : i64} {
  func.func @_score_kernel(%arg0: i32, %arg1: memref<32x32xf32, #tpu.memory_space<vmem>>, %arg2: memref<1x32xf32, #tpu.memory_space<vmem>>, %arg3: memref<1x1x32xf32, #tpu.memory_space<vmem>>) attributes {dimension_semantics = [#tpu.dimension_semantics<parallel>], iteration_bounds = array<i64: 1>, scalar_prefetch = 0 : i64, scratch_operands = 0 : i64, tpu.core_type = #tpu.core_type<tc>, window_params = [{transform_indices = @transform_0, window_bounds = array<i64: 32, 32>}, {pipeline_mode = #tpu.pipeline_mode<synchronous>, transform_indices = @transform_1, window_bounds = array<i64: 1, 32>}, {transform_indices = @transform_2, window_bounds = array<i64: 1, 1, 32>}]} {
    %c0 = arith.constant 0 : index
    %c0_0 = arith.constant 0 : index
    %0 = vector.load %arg2[%c0, %c0_0] : memref<1x32xf32, #tpu.memory_space<vmem>>, vector<1x32xf32>
    %c0_1 = arith.constant 0 : index
    %c0_2 = arith.constant 0 : index
    %1 = vector.load %arg1[%c0_1, %c0_2] : memref<32x32xf32, #tpu.memory_space<vmem>>, vector<32x32xf32>
    %cst = arith.constant dense<0.000000e+00> : vector<1x32xf32>
    %2 = tpu.matmul %0, %1, %cst {dimension_numbers = #tpu.dot_dimension_numbers<[1], [1], [0], [0], [0, 0, 1, 0], [], []>} : vector<1x32xf32>, vector<32x32xf32>, vector<1x32xf32> -> vector<1x32xf32>
    %c0_3 = arith.constant 0 : index
    %c0_4 = arith.constant 0 : index
    %c0_5 = arith.constant 0 : index
    %3 = vector.load %arg3[%c0_3, %c0_4, %c0_5] : memref<1x1x32xf32, #tpu.memory_space<vmem>>, vector<1x1x32xf32>
    %4 = vector.shape_cast %3 : vector<1x1x32xf32> to vector<1x32xf32>
    %5 = vector.shape_cast %2 : vector<1x32xf32> to vector<1x1x32xf32>
    tpu.vector_store %arg3[%c0_3, %c0_4, %c0_5], %5 {strides = array<i32>} : memref<1x1x32xf32, #tpu.memory_space<vmem>>, vector<1x1x32xf32>,
    return
  }
  func.func @transform_0(%arg0: i32) -> (i32, i32) {
    %c0_i32 = arith.constant 0 : i32
    %c0_i32_0 = arith.constant 0 : i32
    return %arg0, %c0_i32 : i32, i32
  }
  func.func @transform_1(%arg0: i32) -> (i32, i32) {
    %c0_i32 = arith.constant 0 : i32
    %c0_i32_0 = arith.constant 0 : i32
    %c0_i32_1 = arith.constant 0 : i32
    return %c0_i32, %c0_i32_0 : i32, i32
  }
  func.func @transform_2(%arg0: i32) -> (i32, i32, i32) {
    %c0_i32 = arith.constant 0 : i32
    %c0_i32_0 = arith.constant 0 : i32
    %c0_i32_1 = arith.constant 0 : i32
    return %arg0, %c0_i32, %c0_i32_0 : i32, i32, i32
  }
}

module attributes {stable_mosaic.version = 11 : i64} {
  func.func @_gate_norm_qkv_kernel(%arg0: i32, %arg1: memref<8x32xf32, #tpu.memory_space<vmem>>, %arg2: memref<8x1xf32, #tpu.memory_space<vmem>>, %arg3: memref<1x32xf32, #tpu.memory_space<vmem>>, %arg4: memref<1x32xf32, #tpu.memory_space<vmem>>, %arg5: memref<1x32xf32, #tpu.memory_space<vmem>>, %arg6: memref<1x32xf32, #tpu.memory_space<vmem>>, %arg7: memref<32x32xbf16, #tpu.memory_space<vmem>>, %arg8: memref<1x32xf32, #tpu.memory_space<vmem>>, %arg9: memref<32x32xbf16, #tpu.memory_space<vmem>>, %arg10: memref<1x32xf32, #tpu.memory_space<vmem>>, %arg11: memref<32x32xbf16, #tpu.memory_space<vmem>>, %arg12: memref<1x32xf32, #tpu.memory_space<vmem>>, %arg13: memref<8x32xf32, #tpu.memory_space<vmem>>, %arg14: memref<8x32xbf16, #tpu.memory_space<vmem>>, %arg15: memref<8x32xbf16, #tpu.memory_space<vmem>>, %arg16: memref<8x32xbf16, #tpu.memory_space<vmem>>) attributes {dimension_semantics = [#tpu.dimension_semantics<parallel>], iteration_bounds = array<i64: 1>, scalar_prefetch = 0 : i64, scratch_operands = 0 : i64, tpu.core_type = #tpu.core_type<tc>, window_params = [{transform_indices = @transform_0, window_bounds = array<i64: 8, 32>}, {transform_indices = @transform_1, window_bounds = array<i64: 8, 1>}, {pipeline_mode = #tpu.pipeline_mode<synchronous>, transform_indices = @transform_2, window_bounds = array<i64: 1, 32>}, {pipeline_mode = #tpu.pipeline_mode<synchronous>, transform_indices = @transform_3, window_bounds = array<i64: 1, 32>}, {pipeline_mode = #tpu.pipeline_mode<synchronous>, transform_indices = @transform_4, window_bounds = array<i64: 1, 32>}, {pipeline_mode = #tpu.pipeline_mode<synchronous>, transform_indices = @transform_5, window_bounds = array<i64: 1, 32>}, {pipeline_mode = #tpu.pipeline_mode<synchronous>, transform_indices = @transform_6, window_bounds = array<i64: 32, 32>}, {pipeline_mode = #tpu.pipeline_mode<synchronous>, transform_indices = @transform_7, window_bounds = array<i64: 1, 32>}, {pipeline_mode = #tpu.pipeline_mode<synchronous>, transform_indices = @transform_8, window_bounds = array<i64: 32, 32>}, {pipeline_mode = #tpu.pipeline_mode<synchronous>, transform_indices = @transform_9, window_bounds = array<i64: 1, 32>}, {pipeline_mode = #tpu.pipeline_mode<synchronous>, transform_indices = @transform_10, window_bounds = array<i64: 32, 32>}, {pipeline_mode = #tpu.pipeline_mode<synchronous>, transform_indices = @transform_11, window_bounds = array<i64: 1, 32>}, {transform_indices = @transform_12, window_bounds = array<i64: 8, 32>}, {transform_indices = @transform_13, window_bounds = array<i64: 8, 32>}, {transform_indices = @transform_14, window_bounds = array<i64: 8, 32>}, {transform_indices = @transform_15, window_bounds = array<i64: 8, 32>}]} {
    %c0 = arith.constant 0 : index
    %c0_0 = arith.constant 0 : index
    %0 = vector.load %arg1[%c0, %c0_0] : memref<8x32xf32, #tpu.memory_space<vmem>>, vector<8x32xf32>
    %c0_1 = arith.constant 0 : index
    %c0_2 = arith.constant 0 : index
    %1 = vector.load %arg2[%c0_1, %c0_2] : memref<8x1xf32, #tpu.memory_space<vmem>>, vector<8x1xf32>
    %2 = arith.negf %1 : vector<8x1xf32>
    %3 = math.exp %2 : vector<8x1xf32>
    %cst = arith.constant 1.000000e+00 : f32
    %4 = vector.broadcast %cst : f32 to vector<8x1xf32>
    %5 = arith.addf %4, %3 : vector<8x1xf32>
    %6 = arith.divf %4, %5 : vector<8x1xf32>
    %7 = vector.broadcast %6 : vector<8x1xf32> to vector<8x32xf32>
    %8 = arith.mulf %0, %7 : vector<8x32xf32>
    %c0_3 = arith.constant 0 : index
    %c0_4 = arith.constant 0 : index
    %9 = vector.load %arg3[%c0_3, %c0_4] : memref<1x32xf32, #tpu.memory_space<vmem>>, vector<1x32xf32>
    %c0_5 = arith.constant 0 : index
    %c0_6 = arith.constant 0 : index
    %10 = vector.load %arg4[%c0_5, %c0_6] : memref<1x32xf32, #tpu.memory_space<vmem>>, vector<1x32xf32>
    %cst_7 = arith.constant dense<0.000000e+00> : vector<8xf32>
    %11 = vector.multi_reduction <add>, %8, %cst_7 [1] : vector<8x32xf32> to vector<8xf32>
    %12 = vector.shape_cast %11 : vector<8xf32> to vector<8x1xf32>
    %cst_8 = arith.constant 3.200000e+01 : f32
    %13 = vector.broadcast %cst_8 : f32 to vector<8x1xf32>
    %14 = arith.divf %12, %13 : vector<8x1xf32>
    %15 = vector.broadcast %14 : vector<8x1xf32> to vector<8x32xf32>
    %16 = arith.subf %8, %15 : vector<8x32xf32>
    %17 = arith.mulf %16, %16 : vector<8x32xf32>
    %cst_9 = arith.constant dense<0.000000e+00> : vector<8xf32>
    %18 = vector.multi_reduction <add>, %17, %cst_9 [1] : vector<8x32xf32> to vector<8xf32>
    %19 = vector.shape_cast %18 : vector<8xf32> to vector<8x1xf32>
    %cst_10 = arith.constant 3.200000e+01 : f32
    %20 = vector.broadcast %cst_10 : f32 to vector<8x1xf32>
    %21 = arith.divf %19, %20 : vector<8x1xf32>
    %22 = vector.broadcast %14 : vector<8x1xf32> to vector<8x32xf32>
    %23 = arith.subf %8, %22 : vector<8x32xf32>
    %cst_11 = arith.constant 9.99999974E-6 : f32
    %24 = vector.broadcast %cst_11 : f32 to vector<8x1xf32>
    %25 = arith.addf %21, %24 : vector<8x1xf32>
    %26 = math.rsqrt %25 : vector<8x1xf32>
    %27 = vector.broadcast %26 : vector<8x1xf32> to vector<8x32xf32>
    %28 = arith.mulf %23, %27 : vector<8x32xf32>
    %29 = vector.broadcast %9 : vector<1x32xf32> to vector<8x32xf32>
    %30 = arith.mulf %28, %29 : vector<8x32xf32>
    %31 = vector.broadcast %10 : vector<1x32xf32> to vector<8x32xf32>
    %32 = arith.addf %30, %31 : vector<8x32xf32>
    %c0_12 = arith.constant 0 : index
    %c0_13 = arith.constant 0 : index
    %33 = vector.load %arg13[%c0_12, %c0_13] : memref<8x32xf32, #tpu.memory_space<vmem>>, vector<8x32xf32>
    tpu.vector_store %arg13[%c0_12, %c0_13], %32 {strides = array<i32>} : memref<8x32xf32, #tpu.memory_space<vmem>>, vector<8x32xf32>,
    %c0_14 = arith.constant 0 : index
    %c0_15 = arith.constant 0 : index
    %34 = vector.load %arg5[%c0_14, %c0_15] : memref<1x32xf32, #tpu.memory_space<vmem>>, vector<1x32xf32>
    %c0_16 = arith.constant 0 : index
    %c0_17 = arith.constant 0 : index
    %35 = vector.load %arg6[%c0_16, %c0_17] : memref<1x32xf32, #tpu.memory_space<vmem>>, vector<1x32xf32>
    %cst_18 = arith.constant dense<0.000000e+00> : vector<8xf32>
    %36 = vector.multi_reduction <add>, %32, %cst_18 [1] : vector<8x32xf32> to vector<8xf32>
    %37 = vector.shape_cast %36 : vector<8xf32> to vector<8x1xf32>
    %cst_19 = arith.constant 3.200000e+01 : f32
    %38 = vector.broadcast %cst_19 : f32 to vector<8x1xf32>
    %39 = arith.divf %37, %38 : vector<8x1xf32>
    %40 = vector.broadcast %39 : vector<8x1xf32> to vector<8x32xf32>
    %41 = arith.subf %32, %40 : vector<8x32xf32>
    %42 = arith.mulf %41, %41 : vector<8x32xf32>
    %cst_20 = arith.constant dense<0.000000e+00> : vector<8xf32>
    %43 = vector.multi_reduction <add>, %42, %cst_20 [1] : vector<8x32xf32> to vector<8xf32>
    %44 = vector.shape_cast %43 : vector<8xf32> to vector<8x1xf32>
    %cst_21 = arith.constant 3.200000e+01 : f32
    %45 = vector.broadcast %cst_21 : f32 to vector<8x1xf32>
    %46 = arith.divf %44, %45 : vector<8x1xf32>
    %47 = vector.broadcast %39 : vector<8x1xf32> to vector<8x32xf32>
    %48 = arith.subf %32, %47 : vector<8x32xf32>
    %cst_22 = arith.constant 9.99999974E-6 : f32
    %49 = vector.broadcast %cst_22 : f32 to vector<8x1xf32>
    %50 = arith.addf %46, %49 : vector<8x1xf32>
    %51 = math.rsqrt %50 : vector<8x1xf32>
    %52 = vector.broadcast %51 : vector<8x1xf32> to vector<8x32xf32>
    %53 = arith.mulf %48, %52 : vector<8x32xf32>
    %54 = vector.broadcast %34 : vector<1x32xf32> to vector<8x32xf32>
    %55 = arith.mulf %53, %54 : vector<8x32xf32>
    %56 = vector.broadcast %35 : vector<1x32xf32> to vector<8x32xf32>
    %57 = arith.addf %55, %56 : vector<8x32xf32>
    %58 = arith.truncf %57 : vector<8x32xf32> to vector<8x32xbf16>
    %c0_23 = arith.constant 0 : index
    %c0_24 = arith.constant 0 : index
    %59 = vector.load %arg7[%c0_23, %c0_24] : memref<32x32xbf16, #tpu.memory_space<vmem>>, vector<32x32xbf16>
    %cst_25 = arith.constant dense<0.000000e+00> : vector<8x32xf32>
    %60 = tpu.matmul %58, %59, %cst_25 {dimension_numbers = #tpu.dot_dimension_numbers<[1], [0], [0], [1], [0, 0, 1, 1], [], []>} : vector<8x32xbf16>, vector<32x32xbf16>, vector<8x32xf32> -> vector<8x32xf32>
    %c0_26 = arith.constant 0 : index
    %c0_27 = arith.constant 0 : index
    %61 = vector.load %arg8[%c0_26, %c0_27] : memref<1x32xf32, #tpu.memory_space<vmem>>, vector<1x32xf32>
    %62 = vector.broadcast %61 : vector<1x32xf32> to vector<8x32xf32>
    %63 = arith.addf %60, %62 : vector<8x32xf32>
    %64 = arith.truncf %63 : vector<8x32xf32> to vector<8x32xbf16>
    %c0_28 = arith.constant 0 : index
    %c0_29 = arith.constant 0 : index
    %65 = vector.load %arg14[%c0_28, %c0_29] : memref<8x32xbf16, #tpu.memory_space<vmem>>, vector<8x32xbf16>
    tpu.vector_store %arg14[%c0_28, %c0_29], %64 {strides = array<i32>} : memref<8x32xbf16, #tpu.memory_space<vmem>>, vector<8x32xbf16>,
    %c0_30 = arith.constant 0 : index
    %c0_31 = arith.constant 0 : index
    %66 = vector.load %arg9[%c0_30, %c0_31] : memref<32x32xbf16, #tpu.memory_space<vmem>>, vector<32x32xbf16>
    %cst_32 = arith.constant dense<0.000000e+00> : vector<8x32xf32>
    %67 = tpu.matmul %58, %66, %cst_32 {dimension_numbers = #tpu.dot_dimension_numbers<[1], [0], [0], [1], [0, 0, 1, 1], [], []>} : vector<8x32xbf16>, vector<32x32xbf16>, vector<8x32xf32> -> vector<8x32xf32>
    %c0_33 = arith.constant 0 : index
    %c0_34 = arith.constant 0 : index
    %68 = vector.load %arg10[%c0_33, %c0_34] : memref<1x32xf32, #tpu.memory_space<vmem>>, vector<1x32xf32>
    %69 = vector.broadcast %68 : vector<1x32xf32> to vector<8x32xf32>
    %70 = arith.addf %67, %69 : vector<8x32xf32>
    %71 = arith.truncf %70 : vector<8x32xf32> to vector<8x32xbf16>
    %c0_35 = arith.constant 0 : index
    %c0_36 = arith.constant 0 : index
    %72 = vector.load %arg15[%c0_35, %c0_36] : memref<8x32xbf16, #tpu.memory_space<vmem>>, vector<8x32xbf16>
    tpu.vector_store %arg15[%c0_35, %c0_36], %71 {strides = array<i32>} : memref<8x32xbf16, #tpu.memory_space<vmem>>, vector<8x32xbf16>,
    %c0_37 = arith.constant 0 : index
    %c0_38 = arith.constant 0 : index
    %73 = vector.load %arg11[%c0_37, %c0_38] : memref<32x32xbf16, #tpu.memory_space<vmem>>, vector<32x32xbf16>
    %cst_39 = arith.constant dense<0.000000e+00> : vector<8x32xf32>
    %74 = tpu.matmul %58, %73, %cst_39 {dimension_numbers = #tpu.dot_dimension_numbers<[1], [0], [0], [1], [0, 0, 1, 1], [], []>} : vector<8x32xbf16>, vector<32x32xbf16>, vector<8x32xf32> -> vector<8x32xf32>
    %c0_40 = arith.constant 0 : index
    %c0_41 = arith.constant 0 : index
    %75 = vector.load %arg12[%c0_40, %c0_41] : memref<1x32xf32, #tpu.memory_space<vmem>>, vector<1x32xf32>
    %76 = vector.broadcast %75 : vector<1x32xf32> to vector<8x32xf32>
    %77 = arith.addf %74, %76 : vector<8x32xf32>
    %78 = arith.truncf %77 : vector<8x32xf32> to vector<8x32xbf16>
    %c0_42 = arith.constant 0 : index
    %c0_43 = arith.constant 0 : index
    %79 = vector.load %arg16[%c0_42, %c0_43] : memref<8x32xbf16, #tpu.memory_space<vmem>>, vector<8x32xbf16>
    tpu.vector_store %arg16[%c0_42, %c0_43], %78 {strides = array<i32>} : memref<8x32xbf16, #tpu.memory_space<vmem>>, vector<8x32xbf16>,
    return
  }
  func.func @transform_0(%arg0: i32) -> (i32, i32) {
    %c0_i32 = arith.constant 0 : i32
    %c0_i32_0 = arith.constant 0 : i32
    return %arg0, %c0_i32 : i32, i32
  }
  func.func @transform_1(%arg0: i32) -> (i32, i32) {
    %c0_i32 = arith.constant 0 : i32
    %c0_i32_0 = arith.constant 0 : i32
    return %arg0, %c0_i32 : i32, i32
  }
  func.func @transform_2(%arg0: i32) -> (i32, i32) {
    %c0_i32 = arith.constant 0 : i32
    %c0_i32_0 = arith.constant 0 : i32
    %c0_i32_1 = arith.constant 0 : i32
    return %c0_i32, %c0_i32_0 : i32, i32
  }
  func.func @transform_3(%arg0: i32) -> (i32, i32) {
    %c0_i32 = arith.constant 0 : i32
    %c0_i32_0 = arith.constant 0 : i32
    %c0_i32_1 = arith.constant 0 : i32
    return %c0_i32, %c0_i32_0 : i32, i32
  }
  func.func @transform_4(%arg0: i32) -> (i32, i32) {
    %c0_i32 = arith.constant 0 : i32
    %c0_i32_0 = arith.constant 0 : i32
    %c0_i32_1 = arith.constant 0 : i32
    return %c0_i32, %c0_i32_0 : i32, i32
  }
  func.func @transform_5(%arg0: i32) -> (i32, i32) {
    %c0_i32 = arith.constant 0 : i32
    %c0_i32_0 = arith.constant 0 : i32
    %c0_i32_1 = arith.constant 0 : i32
    return %c0_i32, %c0_i32_0 : i32, i32
  }
  func.func @transform_6(%arg0: i32) -> (i32, i32) {
    %c0_i32 = arith.constant 0 : i32
    %c0_i32_0 = arith.constant 0 : i32
    %c0_i32_1 = arith.constant 0 : i32
    return %c0_i32, %c0_i32_0 : i32, i32
  }
  func.func @transform_7(%arg0: i32) -> (i32, i32) {
    %c0_i32 = arith.constant 0 : i32
    %c0_i32_0 = arith.constant 0 : i32
    %c0_i32_1 = arith.constant 0 : i32
    return %c0_i32, %c0_i32_0 : i32, i32
  }
  func.func @transform_8(%arg0: i32) -> (i32, i32) {
    %c0_i32 = arith.constant 0 : i32
    %c0_i32_0 = arith.constant 0 : i32
    %c0_i32_1 = arith.constant 0 : i32
    return %c0_i32, %c0_i32_0 : i32, i32
  }
  func.func @transform_9(%arg0: i32) -> (i32, i32) {
    %c0_i32 = arith.constant 0 : i32
    %c0_i32_0 = arith.constant 0 : i32
    %c0_i32_1 = arith.constant 0 : i32
    return %c0_i32, %c0_i32_0 : i32, i32
  }
  func.func @transform_10(%arg0: i32) -> (i32, i32) {
    %c0_i32 = arith.constant 0 : i32
    %c0_i32_0 = arith.constant 0 : i32
    %c0_i32_1 = arith.constant 0 : i32
    return %c0_i32, %c0_i32_0 : i32, i32
  }
  func.func @transform_11(%arg0: i32) -> (i32, i32) {
    %c0_i32 = arith.constant 0 : i32
    %c0_i32_0 = arith.constant 0 : i32
    %c0_i32_1 = arith.constant 0 : i32
    return %c0_i32, %c0_i32_0 : i32, i32
  }
  func.func @transform_12(%arg0: i32) -> (i32, i32) {
    %c0_i32 = arith.constant 0 : i32
    %c0_i32_0 = arith.constant 0 : i32
    return %arg0, %c0_i32 : i32, i32
  }
  func.func @transform_13(%arg0: i32) -> (i32, i32) {
    %c0_i32 = arith.constant 0 : i32
    %c0_i32_0 = arith.constant 0 : i32
    return %arg0, %c0_i32 : i32, i32
  }
  func.func @transform_14(%arg0: i32) -> (i32, i32) {
    %c0_i32 = arith.constant 0 : i32
    %c0_i32_0 = arith.constant 0 : i32
    return %arg0, %c0_i32 : i32, i32
  }
  func.func @transform_15(%arg0: i32) -> (i32, i32) {
    %c0_i32 = arith.constant 0 : i32
    %c0_i32_0 = arith.constant 0 : i32
    return %arg0, %c0_i32 : i32, i32
  }
}

module attributes {stable_mosaic.version = 11 : i64} {
  func.func @_attention_kernel(%arg0: i32, %arg1: i32, %arg2: memref<1x1x4x8xbf16, #tpu.memory_space<vmem>>, %arg3: memref<1x1x4x8xbf16, #tpu.memory_space<vmem>>, %arg4: memref<1x1x4x8xbf16, #tpu.memory_space<vmem>>, %arg5: memref<1x1x4x8xbf16, #tpu.memory_space<vmem>>) attributes {dimension_semantics = [#tpu.dimension_semantics<parallel>, #tpu.dimension_semantics<parallel>], iteration_bounds = array<i64: 2, 4>, scalar_prefetch = 0 : i64, scratch_operands = 0 : i64, tpu.core_type = #tpu.core_type<tc>, window_params = [{transform_indices = @transform_0, window_bounds = array<i64: 1, 1, 4, 8>}, {transform_indices = @transform_1, window_bounds = array<i64: 1, 1, 4, 8>}, {transform_indices = @transform_2, window_bounds = array<i64: 1, 1, 4, 8>}, {transform_indices = @transform_3, window_bounds = array<i64: 1, 1, 4, 8>}]} {
    %c0 = arith.constant 0 : index
    %c0_0 = arith.constant 0 : index
    %c0_1 = arith.constant 0 : index
    %c0_2 = arith.constant 0 : index
    %0 = vector.load %arg2[%c0, %c0_0, %c0_1, %c0_2] : memref<1x1x4x8xbf16, #tpu.memory_space<vmem>>, vector<1x1x4x8xbf16>
    %1 = vector.shape_cast %0 : vector<1x1x4x8xbf16> to vector<4x8xbf16>
    %c0_3 = arith.constant 0 : index
    %c0_4 = arith.constant 0 : index
    %c0_5 = arith.constant 0 : index
    %c0_6 = arith.constant 0 : index
    %2 = vector.load %arg3[%c0_3, %c0_4, %c0_5, %c0_6] : memref<1x1x4x8xbf16, #tpu.memory_space<vmem>>, vector<1x1x4x8xbf16>
    %3 = vector.shape_cast %2 : vector<1x1x4x8xbf16> to vector<4x8xbf16>
    %c0_7 = arith.constant 0 : index
    %c0_8 = arith.constant 0 : index
    %c0_9 = arith.constant 0 : index
    %c0_10 = arith.constant 0 : index
    %4 = vector.load %arg4[%c0_7, %c0_8, %c0_9, %c0_10] : memref<1x1x4x8xbf16, #tpu.memory_space<vmem>>, vector<1x1x4x8xbf16>
    %5 = vector.shape_cast %4 : vector<1x1x4x8xbf16> to vector<4x8xbf16>
    %cst = arith.constant dense<0.000000e+00> : vector<4x4xf32>
    %6 = tpu.matmul %1, %3, %cst {dimension_numbers = #tpu.dot_dimension_numbers<[1], [1], [0], [0], [0, 0, 1, 0], [], []>} : vector<4x8xbf16>, vector<4x8xbf16>, vector<4x4xf32> -> vector<4x4xf32>
    %cst_11 = arith.constant 0.353553385 : f32
    %7 = vector.broadcast %cst_11 : f32 to vector<4x4xf32>
    %8 = arith.mulf %6, %7 : vector<4x4xf32>
    %cst_12 = arith.constant dense<0xFF800000> : vector<4xf32>
    %9 = vector.multi_reduction <maximumf>, %8, %cst_12 [1] : vector<4x4xf32> to vector<4xf32>
    %cst_13 = arith.constant 0xFF800000 : f32
    %10 = vector.broadcast %cst_13 : f32 to vector<4xf32>
    %11 = arith.maximumf %10, %9 : vector<4xf32>
    %12 = vector.shape_cast %11 : vector<4xf32> to vector<4x1xf32>
    %13 = vector.broadcast %12 : vector<4x1xf32> to vector<4x4xf32>
    %14 = arith.subf %8, %13 : vector<4x4xf32>
    %15 = math.exp %14 : vector<4x4xf32>
    %cst_14 = arith.constant dense<0.000000e+00> : vector<4xf32>
    %16 = vector.multi_reduction <add>, %15, %cst_14 [1] : vector<4x4xf32> to vector<4xf32>
    %17 = vector.shape_cast %16 : vector<4xf32> to vector<4x1xf32>
    %18 = vector.broadcast %17 : vector<4x1xf32> to vector<4x4xf32>
    %19 = arith.divf %15, %18 : vector<4x4xf32>
    %20 = arith.truncf %19 : vector<4x4xf32> to vector<4x4xbf16>
    %cst_15 = arith.constant dense<0.000000e+00> : vector<4x8xf32>
    %21 = tpu.matmul %20, %5, %cst_15 {dimension_numbers = #tpu.dot_dimension_numbers<[1], [0], [0], [1], [0, 0, 1, 1], [], []>} : vector<4x4xbf16>, vector<4x8xbf16>, vector<4x8xf32> -> vector<4x8xf32>
    %22 = arith.truncf %21 : vector<4x8xf32> to vector<4x8xbf16>
    %c0_16 = arith.constant 0 : index
    %c0_17 = arith.constant 0 : index
    %c0_18 = arith.constant 0 : index
    %c0_19 = arith.constant 0 : index
    %23 = vector.load %arg5[%c0_16, %c0_17, %c0_18, %c0_19] : memref<1x1x4x8xbf16, #tpu.memory_space<vmem>>, vector<1x1x4x8xbf16>
    %24 = vector.shape_cast %23 : vector<1x1x4x8xbf16> to vector<4x8xbf16>
    %25 = vector.shape_cast %22 : vector<4x8xbf16> to vector<1x1x4x8xbf16>
    tpu.vector_store %arg5[%c0_16, %c0_17, %c0_18, %c0_19], %25 {strides = array<i32>} : memref<1x1x4x8xbf16, #tpu.memory_space<vmem>>, vector<1x1x4x8xbf16>,
    return
  }
  func.func @transform_0(%arg0: i32, %arg1: i32) -> (i32, i32, i32, i32) {
    %c0_i32 = arith.constant 0 : i32
    %c0_i32_0 = arith.constant 0 : i32
    %c0_i32_1 = arith.constant 0 : i32
    return %arg0, %arg1, %c0_i32, %c0_i32_0 : i32, i32, i32, i32
  }
  func.func @transform_1(%arg0: i32, %arg1: i32) -> (i32, i32, i32, i32) {
    %c0_i32 = arith.constant 0 : i32
    %c0_i32_0 = arith.constant 0 : i32
    %c0_i32_1 = arith.constant 0 : i32
    return %arg0, %arg1, %c0_i32, %c0_i32_0 : i32, i32, i32, i32
  }
  func.func @transform_2(%arg0: i32, %arg1: i32) -> (i32, i32, i32, i32) {
    %c0_i32 = arith.constant 0 : i32
    %c0_i32_0 = arith.constant 0 : i32
    %c0_i32_1 = arith.constant 0 : i32
    return %arg0, %arg1, %c0_i32, %c0_i32_0 : i32, i32, i32, i32
  }
  func.func @transform_3(%arg0: i32, %arg1: i32) -> (i32, i32, i32, i32) {
    %c0_i32 = arith.constant 0 : i32
    %c0_i32_0 = arith.constant 0 : i32
    %c0_i32_1 = arith.constant 0 : i32
    return %arg0, %arg1, %c0_i32, %c0_i32_0 : i32, i32, i32, i32
  }
}

module attributes {stable_mosaic.version = 11 : i64} {
  func.func @_outproj_ffn_kernel(%arg0: i32, %arg1: memref<8x32xbf16, #tpu.memory_space<vmem>>, %arg2: memref<8x32xf32, #tpu.memory_space<vmem>>, %arg3: memref<32x32xbf16, #tpu.memory_space<vmem>>, %arg4: memref<1x32xf32, #tpu.memory_space<vmem>>, %arg5: memref<1x32xf32, #tpu.memory_space<vmem>>, %arg6: memref<1x32xf32, #tpu.memory_space<vmem>>, %arg7: memref<32x64xbf16, #tpu.memory_space<vmem>>, %arg8: memref<1x64xf32, #tpu.memory_space<vmem>>, %arg9: memref<64x32xbf16, #tpu.memory_space<vmem>>, %arg10: memref<1x32xf32, #tpu.memory_space<vmem>>, %arg11: memref<8x32xf32, #tpu.memory_space<vmem>>) attributes {dimension_semantics = [#tpu.dimension_semantics<parallel>], iteration_bounds = array<i64: 1>, scalar_prefetch = 0 : i64, scratch_operands = 0 : i64, tpu.core_type = #tpu.core_type<tc>, window_params = [{transform_indices = @transform_0, window_bounds = array<i64: 8, 32>}, {transform_indices = @transform_1, window_bounds = array<i64: 8, 32>}, {pipeline_mode = #tpu.pipeline_mode<synchronous>, transform_indices = @transform_2, window_bounds = array<i64: 32, 32>}, {pipeline_mode = #tpu.pipeline_mode<synchronous>, transform_indices = @transform_3, window_bounds = array<i64: 1, 32>}, {pipeline_mode = #tpu.pipeline_mode<synchronous>, transform_indices = @transform_4, window_bounds = array<i64: 1, 32>}, {pipeline_mode = #tpu.pipeline_mode<synchronous>, transform_indices = @transform_5, window_bounds = array<i64: 1, 32>}, {pipeline_mode = #tpu.pipeline_mode<synchronous>, transform_indices = @transform_6, window_bounds = array<i64: 32, 64>}, {pipeline_mode = #tpu.pipeline_mode<synchronous>, transform_indices = @transform_7, window_bounds = array<i64: 1, 64>}, {pipeline_mode = #tpu.pipeline_mode<synchronous>, transform_indices = @transform_8, window_bounds = array<i64: 64, 32>}, {pipeline_mode = #tpu.pipeline_mode<synchronous>, transform_indices = @transform_9, window_bounds = array<i64: 1, 32>}, {transform_indices = @transform_10, window_bounds = array<i64: 8, 32>}]} {
    %c0 = arith.constant 0 : index
    %c0_0 = arith.constant 0 : index
    %0 = vector.load %arg2[%c0, %c0_0] : memref<8x32xf32, #tpu.memory_space<vmem>>, vector<8x32xf32>
    %c0_1 = arith.constant 0 : index
    %c0_2 = arith.constant 0 : index
    %1 = vector.load %arg1[%c0_1, %c0_2] : memref<8x32xbf16, #tpu.memory_space<vmem>>, vector<8x32xbf16>
    %c0_3 = arith.constant 0 : index
    %c0_4 = arith.constant 0 : index
    %2 = vector.load %arg3[%c0_3, %c0_4] : memref<32x32xbf16, #tpu.memory_space<vmem>>, vector<32x32xbf16>
    %cst = arith.constant dense<0.000000e+00> : vector<8x32xf32>
    %3 = tpu.matmul %1, %2, %cst {dimension_numbers = #tpu.dot_dimension_numbers<[1], [0], [0], [1], [0, 0, 1, 1], [], []>} : vector<8x32xbf16>, vector<32x32xbf16>, vector<8x32xf32> -> vector<8x32xf32>
    %c0_5 = arith.constant 0 : index
    %c0_6 = arith.constant 0 : index
    %4 = vector.load %arg4[%c0_5, %c0_6] : memref<1x32xf32, #tpu.memory_space<vmem>>, vector<1x32xf32>
    %5 = vector.broadcast %4 : vector<1x32xf32> to vector<8x32xf32>
    %6 = arith.addf %3, %5 : vector<8x32xf32>
    %7 = arith.addf %0, %6 : vector<8x32xf32>
    %c0_7 = arith.constant 0 : index
    %c0_8 = arith.constant 0 : index
    %8 = vector.load %arg5[%c0_7, %c0_8] : memref<1x32xf32, #tpu.memory_space<vmem>>, vector<1x32xf32>
    %c0_9 = arith.constant 0 : index
    %c0_10 = arith.constant 0 : index
    %9 = vector.load %arg6[%c0_9, %c0_10] : memref<1x32xf32, #tpu.memory_space<vmem>>, vector<1x32xf32>
    %cst_11 = arith.constant dense<0.000000e+00> : vector<8xf32>
    %10 = vector.multi_reduction <add>, %7, %cst_11 [1] : vector<8x32xf32> to vector<8xf32>
    %11 = vector.shape_cast %10 : vector<8xf32> to vector<8x1xf32>
    %cst_12 = arith.constant 3.200000e+01 : f32
    %12 = vector.broadcast %cst_12 : f32 to vector<8x1xf32>
    %13 = arith.divf %11, %12 : vector<8x1xf32>
    %14 = vector.broadcast %13 : vector<8x1xf32> to vector<8x32xf32>
    %15 = arith.subf %7, %14 : vector<8x32xf32>
    %16 = arith.mulf %15, %15 : vector<8x32xf32>
    %cst_13 = arith.constant dense<0.000000e+00> : vector<8xf32>
    %17 = vector.multi_reduction <add>, %16, %cst_13 [1] : vector<8x32xf32> to vector<8xf32>
    %18 = vector.shape_cast %17 : vector<8xf32> to vector<8x1xf32>
    %cst_14 = arith.constant 3.200000e+01 : f32
    %19 = vector.broadcast %cst_14 : f32 to vector<8x1xf32>
    %20 = arith.divf %18, %19 : vector<8x1xf32>
    %21 = vector.broadcast %13 : vector<8x1xf32> to vector<8x32xf32>
    %22 = arith.subf %7, %21 : vector<8x32xf32>
    %cst_15 = arith.constant 9.99999974E-6 : f32
    %23 = vector.broadcast %cst_15 : f32 to vector<8x1xf32>
    %24 = arith.addf %20, %23 : vector<8x1xf32>
    %25 = math.rsqrt %24 : vector<8x1xf32>
    %26 = vector.broadcast %25 : vector<8x1xf32> to vector<8x32xf32>
    %27 = arith.mulf %22, %26 : vector<8x32xf32>
    %28 = vector.broadcast %8 : vector<1x32xf32> to vector<8x32xf32>
    %29 = arith.mulf %27, %28 : vector<8x32xf32>
    %30 = vector.broadcast %9 : vector<1x32xf32> to vector<8x32xf32>
    %31 = arith.addf %29, %30 : vector<8x32xf32>
    %32 = arith.truncf %31 : vector<8x32xf32> to vector<8x32xbf16>
    %c0_16 = arith.constant 0 : index
    %c0_17 = arith.constant 0 : index
    %33 = vector.load %arg7[%c0_16, %c0_17] : memref<32x64xbf16, #tpu.memory_space<vmem>>, vector<32x64xbf16>
    %cst_18 = arith.constant dense<0.000000e+00> : vector<8x64xf32>
    %34 = tpu.matmul %32, %33, %cst_18 {dimension_numbers = #tpu.dot_dimension_numbers<[1], [0], [0], [1], [0, 0, 1, 1], [], []>} : vector<8x32xbf16>, vector<32x64xbf16>, vector<8x64xf32> -> vector<8x64xf32>
    %c0_19 = arith.constant 0 : index
    %c0_20 = arith.constant 0 : index
    %35 = vector.load %arg8[%c0_19, %c0_20] : memref<1x64xf32, #tpu.memory_space<vmem>>, vector<1x64xf32>
    %36 = vector.broadcast %35 : vector<1x64xf32> to vector<8x64xf32>
    %37 = arith.addf %34, %36 : vector<8x64xf32>
    %cst_21 = arith.constant 0.000000e+00 : f32
    %38 = vector.broadcast %cst_21 : f32 to vector<8x64xf32>
    %39 = arith.maximumf %37, %38 : vector<8x64xf32>
    %40 = arith.truncf %39 : vector<8x64xf32> to vector<8x64xbf16>
    %c0_22 = arith.constant 0 : index
    %c0_23 = arith.constant 0 : index
    %41 = vector.load %arg9[%c0_22, %c0_23] : memref<64x32xbf16, #tpu.memory_space<vmem>>, vector<64x32xbf16>
    %cst_24 = arith.constant dense<0.000000e+00> : vector<8x32xf32>
    %42 = tpu.matmul %40, %41, %cst_24 {dimension_numbers = #tpu.dot_dimension_numbers<[1], [0], [0], [1], [0, 0, 1, 1], [], []>} : vector<8x64xbf16>, vector<64x32xbf16>, vector<8x32xf32> -> vector<8x32xf32>
    %c0_25 = arith.constant 0 : index
    %c0_26 = arith.constant 0 : index
    %43 = vector.load %arg10[%c0_25, %c0_26] : memref<1x32xf32, #tpu.memory_space<vmem>>, vector<1x32xf32>
    %44 = vector.broadcast %43 : vector<1x32xf32> to vector<8x32xf32>
    %45 = arith.addf %42, %44 : vector<8x32xf32>
    %46 = arith.addf %7, %45 : vector<8x32xf32>
    %c0_27 = arith.constant 0 : index
    %c0_28 = arith.constant 0 : index
    %47 = vector.load %arg11[%c0_27, %c0_28] : memref<8x32xf32, #tpu.memory_space<vmem>>, vector<8x32xf32>
    tpu.vector_store %arg11[%c0_27, %c0_28], %46 {strides = array<i32>} : memref<8x32xf32, #tpu.memory_space<vmem>>, vector<8x32xf32>,
    return
  }
  func.func @transform_0(%arg0: i32) -> (i32, i32) {
    %c0_i32 = arith.constant 0 : i32
    %c0_i32_0 = arith.constant 0 : i32
    return %arg0, %c0_i32 : i32, i32
  }
  func.func @transform_1(%arg0: i32) -> (i32, i32) {
    %c0_i32 = arith.constant 0 : i32
    %c0_i32_0 = arith.constant 0 : i32
    return %arg0, %c0_i32 : i32, i32
  }
  func.func @transform_2(%arg0: i32) -> (i32, i32) {
    %c0_i32 = arith.constant 0 : i32
    %c0_i32_0 = arith.constant 0 : i32
    %c0_i32_1 = arith.constant 0 : i32
    return %c0_i32, %c0_i32_0 : i32, i32
  }
  func.func @transform_3(%arg0: i32) -> (i32, i32) {
    %c0_i32 = arith.constant 0 : i32
    %c0_i32_0 = arith.constant 0 : i32
    %c0_i32_1 = arith.constant 0 : i32
    return %c0_i32, %c0_i32_0 : i32, i32
  }
  func.func @transform_4(%arg0: i32) -> (i32, i32) {
    %c0_i32 = arith.constant 0 : i32
    %c0_i32_0 = arith.constant 0 : i32
    %c0_i32_1 = arith.constant 0 : i32
    return %c0_i32, %c0_i32_0 : i32, i32
  }
  func.func @transform_5(%arg0: i32) -> (i32, i32) {
    %c0_i32 = arith.constant 0 : i32
    %c0_i32_0 = arith.constant 0 : i32
    %c0_i32_1 = arith.constant 0 : i32
    return %c0_i32, %c0_i32_0 : i32, i32
  }
  func.func @transform_6(%arg0: i32) -> (i32, i32) {
    %c0_i32 = arith.constant 0 : i32
    %c0_i32_0 = arith.constant 0 : i32
    %c0_i32_1 = arith.constant 0 : i32
    return %c0_i32, %c0_i32_0 : i32, i32
  }
  func.func @transform_7(%arg0: i32) -> (i32, i32) {
    %c0_i32 = arith.constant 0 : i32
    %c0_i32_0 = arith.constant 0 : i32
    %c0_i32_1 = arith.constant 0 : i32
    return %c0_i32, %c0_i32_0 : i32, i32
  }
  func.func @transform_8(%arg0: i32) -> (i32, i32) {
    %c0_i32 = arith.constant 0 : i32
    %c0_i32_0 = arith.constant 0 : i32
    %c0_i32_1 = arith.constant 0 : i32
    return %c0_i32, %c0_i32_0 : i32, i32
  }
  func.func @transform_9(%arg0: i32) -> (i32, i32) {
    %c0_i32 = arith.constant 0 : i32
    %c0_i32_0 = arith.constant 0 : i32
    %c0_i32_1 = arith.constant 0 : i32
    return %c0_i32, %c0_i32_0 : i32, i32
  }
  func.func @transform_10(%arg0: i32) -> (i32, i32) {
    %c0_i32 = arith.constant 0 : i32
    %c0_i32_0 = arith.constant 0 : i32
    return %arg0, %c0_i32 : i32, i32
  }
}

</mosaic_0001>

<llo_original>
// kernel: neg.2
$region0: #{neg.2}
  #allocation0 [shape = 's32[1]{0}', space=sflag, size = 0x4, scoped, tag = 'scoped memory for neg.2']
  %s0 = inlined_call_operand.vmem [shape: f32[2,16], index: 0, kind: input, shape index: {}]
  %s1 = inlined_call_operand.vmem [shape: f32[2,16], index: 1, kind: output, shape index: {}]
  %v2 = vld [vmem:[%s0] sm:$0x3]
  %3 = xla_tuple %v2
  %4 = xla_tuple %3
  %v5 = vxor.u32 %v2, 2147483648
  %6 = xla_tuple %v5
  %7 = vst [vmem:[%s1] sm:$0x3] %v5

// kernel: gpool_forward.4
$region0: #{gpool_forward.4}
  #allocation0 [shape = 'u32[]', space=smem, size = 0x4, offset = 0x4, fixed_abs, tag = 'smem constant byte address 0x4 - core index']
  #allocation1 [shape = 'u32[144,128]{1,0:T(1,128)}', space=vmem, size = 0x12000, scoped, tag = 'internal scratch']
  %s0 = inlined_call_operand.vmem [shape: f32[32,32], index: 0, kind: input, shape index: {}]
  %s1 = inlined_call_operand.vmem [shape: f32[1,32], index: 1, kind: input, shape index: {}]
  %s2 = inlined_call_operand.vmem [shape: f32[1,1,32], index: 2, kind: output, shape index: {}]
  %s3 = sld [smem:[#allocation0]]
  $region18: #{gpool_forward.4} parent=0
    _
  %s5 = ssub.s32 1, %s3
  %s6 = scalar_select 0, %s5, %s3
  // Predicated region
  $region2: #{gpool_forward.4} parent=0 // pred_check
    _
  $region3: #{gpool_forward.4} parent=0 // pred_check_branch
    %8 = sbr.rel (0) target = $region5
  $region4: #{gpool_forward.4} parent=0 // pred_region
    _
  $region5: #{gpool_forward.4} parent=0 // pred_fallthru
    _
  // Predicated region
  $region6: #{gpool_forward.4} parent=0 // pred_check
    _
  $region7: #{gpool_forward.4} parent=0 // pred_check_branch
    %10 = sbr.rel (0) target = $region9
  $region8: #{gpool_forward.4} parent=0 // pred_region
    _
  $region9: #{gpool_forward.4} parent=0 // pred_fallthru
    _
  %v11 = vld [vmem:[%s1] sm:$0x1]
  %v12 = vld [vmem:[%s0] sm:$0xff]
  %v13 = vld [vmem:[%s0 + $0x8] sm:$0xff]
  %v14 = vld [vmem:[%s0 + $0x10] sm:$0xff]
  %v15 = vld [vmem:[%s0 + $0x18] sm:$0xff]
  %vm16 = vcmask 261120
  %v18 = vsel %vm16, %v11, 0
  %v21 = vsel %vm16, %v12, 0
  %v24 = vsel %vm16, %v13, 0
  %v27 = vsel %vm16, %v14, 0
  %v30 = vsel %vm16, %v15, 0
  %32 = vmatprep.subr.mxu0 0.0
  %33 = vmatpush1.xpose.msra.mxu0 %v21
  %34 = vmatprep.subr.mxu0 0.0
  %35 = vmatpush1.xpose.msra.mxu0 %v24
  %36 = vmatprep.subr.mxu0 0.0
  %37 = vmatpush1.xpose.msra.mxu0 %v27
  %38 = vmatprep.subr.mxu0 0.0
  %39 = vmatpush1.xpose.msra.mxu0 %v30
  %40 = vmatprep.subr.mxu0 0.0
  %41 = vmatpush1.xpose.msra.mxu0 0.0
  %42 = vmatprep.subr.mxu0 0.0
  %43 = vmatpush1.xpose.msra.mxu0 0.0
  %44 = vmatprep.subr.mxu0 0.0
  %45 = vmatpush1.xpose.msra.mxu0 0.0
  %46 = vmatprep.subr.mxu0 0.0
  %47 = vmatpush1.xpose.msra.mxu0 0.0
  %48 = vmatprep.subr.mxu0 0.0
  %49 = vmatpush1.xpose.msra.mxu0 0.0
  %50 = vmatprep.subr.mxu0 0.0
  %51 = vmatpush1.xpose.msra.mxu0 0.0
  %52 = vmatprep.subr.mxu0 0.0
  %53 = vmatpush1.xpose.msra.mxu0 0.0
  %54 = vmatprep.subr.mxu0 0.0
  %55 = vmatpush1.xpose.msra.mxu0 0.0
  %56 = vmatprep.subr.mxu0 0.0
  %57 = vmatpush1.xpose.msra.mxu0 0.0
  %58 = vmatprep.subr.mxu0 0.0
  %59 = vmatpush1.xpose.msra.mxu0 0.0
  %60 = vmatprep.subr.mxu0 0.0
  %61 = vmatpush1.xpose.msra.mxu0 0.0
  %62 = vmatprep.subr.mxu0 0.0
  %63 = vmatpush1.xpose.msra.mxu0 0.0
  %64 = vmatprep.subr.mxu0 0.0
  %65 = vmatpush1.xpose.msra.mxu0 0.0
  %66 = vmatprep.subr.mxu0 0.0
  %67 = vmatpush1.xpose.msra.mxu0 0.0
  %68 = vmatprep.subr.mxu0 0.0
  %69 = vmatpush1.xpose.msra.mxu0 0.0
  %70 = vmatprep.subr.mxu0 0.0
  %71 = vmatpush1.xpose.msra.mxu0 0.0
  %72 = vmatprep.subr.mxu0 0.0
  %73 = vmatpush1.xpose.msra.mxu0 0.0
  %74 = vmatprep.subr.mxu0 0.0
  %75 = vmatpush1.xpose.msra.mxu0 0.0
  %76 = vmatprep.subr.mxu0 0.0
  %77 = vmatpush1.xpose.msra.mxu0 0.0
  %78 = vmatprep.subr.mxu0 0.0
  %79 = vmatpush1.xpose.msra.mxu0 0.0
  %80 = vmatprep.subr.mxu0 0.0
  %81 = vmatpush1.xpose.msra.mxu0 0.0
  %82 = vmatprep.subr.mxu0 0.0
  %83 = vmatpush1.xpose.msra.mxu0 0.0
  %84 = vmatprep.subr.mxu0 0.0
  %85 = vmatpush1.xpose.msra.mxu0 0.0
  %86 = vmatprep.subr.mxu0 0.0
  %87 = vmatpush1.xpose.msra.mxu0 0.0
  %88 = vmatprep.subr.mxu0 0.0
  %89 = vmatpush1.xpose.msra.mxu0 0.0
  %90 = vmatprep.subr.mxu0 0.0
  %91 = vmatpush1.xpose.msra.mxu0 0.0
  %92 = vmatprep.subr.mxu0 0.0
  %93 = vmatpush1.xpose.msra.mxu0 0.0
  %94 = vmatprep.subr.mxu0 0.0
  %95 = vmatpush1.xpose.msra.mxu0 0.0
  %96 = vmatprep.mubr.f32.mxu0 0.0
  %97 = vmatmul.mubr.f32.gmra.mrb[0].mxu0 %v18
  %v98 = vpop.f32.mrb[0].mxu0
  %v99 = vadd.f32 0.0, %v98
  %v100 = vpop.f32.mrb[0].mxu0
  %101 = vdwg.mxu0
  %vm102 = vcmask 253952
  %103 = vst.msk [vmem:[%s2] sm:$0x1] %vm102, %v99
  // Predicated region
  $region10: #{gpool_forward.4} parent=0 // pred_check
    _
  $region11: #{gpool_forward.4} parent=0 // pred_check_branch
    %105 = sbr.rel (0) target = $region13
  $region12: #{gpool_forward.4} parent=0 // pred_region
    _
  $region13: #{gpool_forward.4} parent=0 // pred_fallthru
    _
  // Predicated region
  $region14: #{gpool_forward.4} parent=0 // pred_check
    _
  $region15: #{gpool_forward.4} parent=0 // pred_check_branch
    %107 = sbr.rel (0) target = $region17
  $region16: #{gpool_forward.4} parent=0 // pred_region
    _
  $region17: #{gpool_forward.4} parent=0 // pred_fallthru
    _

// kernel: neg.3
$region0: #{neg.3}
  #allocation0 [shape = 's32[1]{0}', space=sflag, size = 0x4, scoped, tag = 'scoped memory for neg.3']
  %s0 = inlined_call_operand.vmem [shape: s32[16], index: 0, kind: input, shape index: {}]
  %s1 = inlined_call_operand.vmem [shape: s32[16], index: 1, kind: output, shape index: {}]
  %v2 = vld [vmem:[%s0] sm:$0x1]
  %3 = xla_tuple %v2
  %4 = xla_tuple %3
  %v5 = vsub.s32 0, %v2
  %6 = xla_tuple %v5
  %7 = vst [vmem:[%s1] sm:$0x1] %v5

// kernel: gpool_forward.5
$region0: #{gpool_forward.5}
  #allocation0 [shape = 'u32[]', space=smem, size = 0x4, offset = 0x4, fixed_abs, tag = 'smem constant byte address 0x4 - core index']
  #allocation1 [shape = 'u32[144,128]{1,0:T(1,128)}', space=vmem, size = 0x12000, scoped, tag = 'internal scratch']
  %s0 = inlined_call_operand.vmem [shape: f32[8,32], index: 0, kind: input, shape index: {}]
  %s1 = inlined_call_operand.vmem [shape: f32[8,1], index: 1, kind: input, shape index: {}]
  %s2 = inlined_call_operand.vmem [shape: f32[1,32], index: 2, kind: input, shape index: {}]
  %s3 = inlined_call_operand.vmem [shape: f32[1,32], index: 3, kind: input, shape index: {}]
  %s4 = inlined_call_operand.vmem [shape: f32[1,32], index: 4, kind: input, shape index: {}]
  %s5 = inlined_call_operand.vmem [shape: f32[1,32], index: 5, kind: input, shape index: {}]
  %s6 = inlined_call_operand.vmem [shape: bf16[32,32], index: 6, kind: input, shape index: {}]
  %s7 = inlined_call_operand.vmem [shape: f32[1,32], index: 7, kind: input, shape index: {}]
  %s8 = inlined_call_operand.vmem [shape: bf16[32,32], index: 8, kind: input, shape index: {}]
  %s9 = inlined_call_operand.vmem [shape: f32[1,32], index: 9, kind: input, shape index: {}]
  %s10 = inlined_call_operand.vmem [shape: bf16[32,32], index: 10, kind: input, shape index: {}]
  %s11 = inlined_call_operand.vmem [shape: f32[1,32], index: 11, kind: input, shape index: {}]
  %s12 = inlined_call_operand.vmem [shape: f32[8,32], index: 12, kind: output, shape index: {0}]
  %s13 = inlined_call_operand.vmem [shape: bf16[8,32], index: 13, kind: output, shape index: {1}]
  %s14 = inlined_call_operand.vmem [shape: bf16[8,32], index: 14, kind: output, shape index: {2}]
  %s15 = inlined_call_operand.vmem [shape: bf16[8,32], index: 15, kind: output, shape index: {3}]
  %16 = xla_tuple %s12, %s13, %s14, %s15
  %s17 = sld [smem:[#allocation0]]
  $region82: #{gpool_forward.5} parent=0
    _
  %s19 = ssub.s32 1, %s17
  %s20 = scalar_select 0, %s19, %s17
  // Predicated region
  $region2: #{gpool_forward.5} parent=0 // pred_check
    _
  $region3: #{gpool_forward.5} parent=0 // pred_check_branch
    %22 = sbr.rel (0) target = $region5
  $region4: #{gpool_forward.5} parent=0 // pred_region
    _
  $region5: #{gpool_forward.5} parent=0 // pred_fallthru
    _
  // Predicated region
  $region6: #{gpool_forward.5} parent=0 // pred_check
    _
  $region7: #{gpool_forward.5} parent=0 // pred_check_branch
    %24 = sbr.rel (0) target = $region9
  $region8: #{gpool_forward.5} parent=0 // pred_region
    _
  $region9: #{gpool_forward.5} parent=0 // pred_fallthru
    _
  // Predicated region
  $region10: #{gpool_forward.5} parent=0 // pred_check
    _
  $region11: #{gpool_forward.5} parent=0 // pred_check_branch
    %26 = sbr.rel (0) target = $region13
  $region12: #{gpool_forward.5} parent=0 // pred_region
    _
  $region13: #{gpool_forward.5} parent=0 // pred_fallthru
    _
  // Predicated region
  $region14: #{gpool_forward.5} parent=0 // pred_check
    _
  $region15: #{gpool_forward.5} parent=0 // pred_check_branch
    %28 = sbr.rel (0) target = $region17
  $region16: #{gpool_forward.5} parent=0 // pred_region
    _
  $region17: #{gpool_forward.5} parent=0 // pred_fallthru
    _
  // Predicated region
  $region18: #{gpool_forward.5} parent=0 // pred_check
    _
  $region19: #{gpool_forward.5} parent=0 // pred_check_branch
    %30 = sbr.rel (0) target = $region21
  $region20: #{gpool_forward.5} parent=0 // pred_region
    _
  $region21: #{gpool_forward.5} parent=0 // pred_fallthru
    _
  // Predicated region
  $region22: #{gpool_forward.5} parent=0 // pred_check
    _
  $region23: #{gpool_forward.5} parent=0 // pred_check_branch
    %32 = sbr.rel (0) target = $region25
  $region24: #{gpool_forward.5} parent=0 // pred_region
    _
  $region25: #{gpool_forward.5} parent=0 // pred_fallthru
    _
  // Predicated region
  $region26: #{gpool_forward.5} parent=0 // pred_check
    _
  $region27: #{gpool_forward.5} parent=0 // pred_check_branch
    %34 = sbr.rel (0) target = $region29
  $region28: #{gpool_forward.5} parent=0 // pred_region
    _
  $region29: #{gpool_forward.5} parent=0 // pred_fallthru
    _
  // Predicated region
  $region30: #{gpool_forward.5} parent=0 // pred_check
    _
  $region31: #{gpool_forward.5} parent=0 // pred_check_branch
    %36 = sbr.rel (0) target = $region33
  $region32: #{gpool_forward.5} parent=0 // pred_region
    _
  $region33: #{gpool_forward.5} parent=0 // pred_fallthru
    _
  // Predicated region
  $region34: #{gpool_forward.5} parent=0 // pred_check
    _
  $region35: #{gpool_forward.5} parent=0 // pred_check_branch
    %38 = sbr.rel (0) target = $region37
  $region36: #{gpool_forward.5} parent=0 // pred_region
    _
  $region37: #{gpool_forward.5} parent=0 // pred_fallthru
    _
  // Predicated region
  $region38: #{gpool_forward.5} parent=0 // pred_check
    _
  $region39: #{gpool_forward.5} parent=0 // pred_check_branch
    %40 = sbr.rel (0) target = $region41
  $region40: #{gpool_forward.5} parent=0 // pred_region
    _
  $region41: #{gpool_forward.5} parent=0 // pred_fallthru
    _
  // Predicated region
  $region42: #{gpool_forward.5} parent=0 // pred_check
    _
  $region43: #{gpool_forward.5} parent=0 // pred_check_branch
    %42 = sbr.rel (0) target = $region45
  $region44: #{gpool_forward.5} parent=0 // pred_region
    _
  $region45: #{gpool_forward.5} parent=0 // pred_fallthru
    _
  // Predicated region
  $region46: #{gpool_forward.5} parent=0 // pred_check
    _
  $region47: #{gpool_forward.5} parent=0 // pred_check_branch
    %44 = sbr.rel (0) target = $region49
  $region48: #{gpool_forward.5} parent=0 // pred_region
    _
  $region49: #{gpool_forward.5} parent=0 // pred_fallthru
    _
  %v46 = vld [vmem:[%s0] sm:$0xff]
  %v47 = vld [vmem:[%s1] sm:$0xff]
  %v48 = vxor.u32 %v47, 2147483648
  %v49 = vmul.f32 %v48, 1.442695
  %v50 = vpow.pop %v49
  %v51 = vadd.f32 %v50, 1.0
  %v52 = vrcp.pop %v51
  %v53 = vmul.f32 1.0, %v52
  %55 = vset.pattern.permute.xlu0 0
  %56 = vperm.xlu0 %55, %v53
  %v57 = vpop.permute.xlu0 %56
  %v59 = vmul.f32 %v46, %v57
  %v60 = vld [vmem:[%s2] sm:$0x1]
  %v61 = vld [vmem:[%s3] sm:$0x1]
  %vm62 = vcmask 261120
  %v63 = vsel %vm62, %v59, 0.0
  %64 = vadd.xlane.f32.xlu0 %v63
  %v65 = vpop.xlane.xlu0 %64
  %v66 = vrcp.pop 32.0
  %v67 = vmul.f32 %v65, %v66
  %v68 = vsub.f32 %v59, %v67
  %v69 = vmul.f32 %v68, %v68
  %v70 = vsel %vm62, %v69, 0.0
  %71 = vadd.xlane.f32.xlu0 %v70
  %v72 = vpop.xlane.xlu0 %71
  %v73 = vmul.f32 %v72, %v66
  %v74 = vadd.f32 %v73, 1e-05
  %v75 = vrsqrt.pop %v74
  %v76 = vmul.f32 %v68, %v75
  %v78 = vlaneseq
  %v79 = vshrl.u32 %v78, 7
  %v80 = vsub.s32 0, %v79
  %v81 = vrot.slane %v60, %v80
  %v83 = vmul.f32 %v76, %v81
  %v85 = vlaneseq
  %v86 = vshrl.u32 %v85, 7
  %v87 = vsub.s32 0, %v86
  %v88 = vrot.slane %v61, %v87
  %v90 = vadd.f32 %v83, %v88
  %91 = vst.msk [vmem:[%s12] sm:$0xff] %vm62, %v90
  %v92 = vld [vmem:[%s4] sm:$0x1]
  %v93 = vld [vmem:[%s5] sm:$0x1]
  %v94 = vsel %vm62, %v90, 0.0
  %95 = vadd.xlane.f32.xlu0 %v94
  %v96 = vpop.xlane.xlu0 %95
  %v97 = vmul.f32 %v96, %v66
  %v98 = vsub.f32 %v90, %v97
  %v99 = vmul.f32 %v98, %v98
  %v100 = vsel %vm62, %v99, 0.0
  %101 = vadd.xlane.f32.xlu0 %v100
  %v102 = vpop.xlane.xlu0 %101
  %v103 = vmul.f32 %v102, %v66
  %v104 = vadd.f32 %v103, 1e-05
  %v105 = vrsqrt.pop %v104
  %v106 = vmul.f32 %v98, %v105
  %v108 = vlaneseq
  %v109 = vshrl.u32 %v108, 7
  %v110 = vsub.s32 0, %v109
  %v111 = vrot.slane %v92, %v110
  %v113 = vmul.f32 %v106, %v111
  %v115 = vlaneseq
  %v116 = vshrl.u32 %v115, 7
  %v117 = vsub.s32 0, %v116
  %v118 = vrot.slane %v93, %v117
  %v120 = vadd.f32 %v113, %v118
  %v121 = vpack.c.bf16 %v120, %v120
  %v122 = vld [vmem:[%s6] sm:$0xf]
  %v123 = vld [vmem:[%s6 + $0x4] sm:$0xf]
  %v124 = vld [vmem:[%s6 + $0x8] sm:$0xf]
  %v125 = vld [vmem:[%s6 + $0xc] sm:$0xf]
  %v126 = vld [vmem:[%s7] sm:$0x1]
  %v128 = vlaneseq
  %v129 = vshrl.u32 %v128, 7
  %v130 = vsub.s32 0, %v129
  %v131 = vrot.slane %v126, %v130
  %v137 = vunpack.c.l.b16 %v122
  %v138 = vunpack.c.l.b16 %v123
  %v139 = vunpack.c.l.b16 %v124
  %v140 = vunpack.c.l.b16 %v125
  %v141 = vpack.c.b16 %v138, %v137
  %v142 = vpack.c.b16 %v140, %v139
  %v146 = vsel %vm62, %v121, 0
  %148 = vmatprep.subr.bf16.mxu0 0
  %149 = vmatpush1.bf16.msra.mxu0 %v141
  %150 = vmatprep.subr.bf16.mxu0 0
  %151 = vmatpush1.bf16.msra.mxu0 %v142
  %152 = vmatprep.subr.bf16.mxu0 0
  %153 = vmatpush1.bf16.msra.mxu0 0
  %154 = vmatprep.subr.bf16.mxu0 0
  %155 = vmatpush1.bf16.msra.mxu0 0
  %156 = vmatprep.subr.bf16.mxu0 0
  %157 = vmatpush1.bf16.msra.mxu0 0
  %158 = vmatprep.subr.bf16.mxu0 0
  %159 = vmatpush1.bf16.msra.mxu0 0
  %160 = vmatprep.subr.bf16.mxu0 0
  %161 = vmatpush1.bf16.msra.mxu0 0
  %162 = vmatprep.subr.bf16.mxu0 0
  %163 = vmatpush1.bf16.msra.mxu0 0
  %164 = vmatprep.subr.bf16.mxu0 0
  %165 = vmatpush1.bf16.msra.mxu0 0
  %166 = vmatprep.subr.bf16.mxu0 0
  %167 = vmatpush1.bf16.msra.mxu0 0
  %168 = vmatprep.subr.bf16.mxu0 0
  %169 = vmatpush1.bf16.msra.mxu0 0
  %170 = vmatprep.subr.bf16.mxu0 0
  %171 = vmatpush1.bf16.msra.mxu0 0
  %172 = vmatprep.subr.bf16.mxu0 0
  %173 = vmatpush1.bf16.msra.mxu0 0
  %174 = vmatprep.subr.bf16.mxu0 0
  %175 = vmatpush1.bf16.msra.mxu0 0
  %176 = vmatprep.subr.bf16.mxu0 0
  %177 = vmatpush1.bf16.msra.mxu0 0
  %178 = vmatprep.subr.bf16.mxu0 0
  %179 = vmatpush1.bf16.msra.mxu0 0
  %180 = vmatprep.mubr.bf16.mxu0 0
  %181 = vmatmul.mubr.bf16.gmra.mrb[0].mxu0 %v146
  %v182 = vpop.f32.mrb[0].mxu0
  %v183 = vadd.f32 %v131, %v182
  %v184 = vpop.f32.mrb[0].mxu0
  %v185 = vpop.f32.mrb[0].mxu0
  %v186 = vpop.f32.mrb[0].mxu0
  %187 = vdwg.mxu0
  %v188 = vpack.c.bf16 %v183, %v183
  %vm189 = vcmask 257024
  %190 = vst.msk [vmem:[%s13] sm:$0xf] %vm189, %v188
  %v191 = vld [vmem:[%s8] sm:$0xf]
  %v192 = vld [vmem:[%s8 + $0x4] sm:$0xf]
  %v193 = vld [vmem:[%s8 + $0x8] sm:$0xf]
  %v194 = vld [vmem:[%s8 + $0xc] sm:$0xf]
  %v195 = vld [vmem:[%s9] sm:$0x1]
  %v197 = vlaneseq
  %v198 = vshrl.u32 %v197, 7
  %v199 = vsub.s32 0, %v198
  %v200 = vrot.slane %v195, %v199
  %v206 = vunpack.c.l.b16 %v191
  %v207 = vunpack.c.l.b16 %v192
  %v208 = vunpack.c.l.b16 %v193
  %v209 = vunpack.c.l.b16 %v194
  %v210 = vpack.c.b16 %v207, %v206
  %v211 = vpack.c.b16 %v209, %v208
  %214 = vmatprep.subr.bf16.mxu0 0
  %215 = vmatpush1.bf16.msra.mxu0 %v210
  %216 = vmatprep.subr.bf16.mxu0 0
  %217 = vmatpush1.bf16.msra.mxu0 %v211
  %218 = vmatprep.subr.bf16.mxu0 0
  %219 = vmatpush1.bf16.msra.mxu0 0
  %220 = vmatprep.subr.bf16.mxu0 0
  %221 = vmatpush1.bf16.msra.mxu0 0
  %222 = vmatprep.subr.bf16.mxu0 0
  %223 = vmatpush1.bf16.msra.mxu0 0
  %224 = vmatprep.subr.bf16.mxu0 0
  %225 = vmatpush1.bf16.msra.mxu0 0
  %226 = vmatprep.subr.bf16.mxu0 0
  %227 = vmatpush1.bf16.msra.mxu0 0
  %228 = vmatprep.subr.bf16.mxu0 0
  %229 = vmatpush1.bf16.msra.mxu0 0
  %230 = vmatprep.subr.bf16.mxu0 0
  %231 = vmatpush1.bf16.msra.mxu0 0
  %232 = vmatprep.subr.bf16.mxu0 0
  %233 = vmatpush1.bf16.msra.mxu0 0
  %234 = vmatprep.subr.bf16.mxu0 0
  %235 = vmatpush1.bf16.msra.mxu0 0
  %236 = vmatprep.subr.bf16.mxu0 0
  %237 = vmatpush1.bf16.msra.mxu0 0
  %238 = vmatprep.subr.bf16.mxu0 0
  %239 = vmatpush1.bf16.msra.mxu0 0
  %240 = vmatprep.subr.bf16.mxu0 0
  %241 = vmatpush1.bf16.msra.mxu0 0
  %242 = vmatprep.subr.bf16.mxu0 0
  %243 = vmatpush1.bf16.msra.mxu0 0
  %244 = vmatprep.subr.bf16.mxu0 0
  %245 = vmatpush1.bf16.msra.mxu0 0
  %246 = vmatprep.mubr.bf16.mxu0 0
  %247 = vmatmul.mubr.bf16.gmra.mrb[0].mxu0 %v146
  %v248 = vpop.f32.mrb[0].mxu0
  %v249 = vadd.f32 %v200, %v248
  %v250 = vpop.f32.mrb[0].mxu0
  %v251 = vpop.f32.mrb[0].mxu0
  %v252 = vpop.f32.mrb[0].mxu0
  %253 = vdwg.mxu0
  %v254 = vpack.c.bf16 %v249, %v249
  %255 = vst.msk [vmem:[%s14] sm:$0xf] %vm189, %v254
  %v256 = vld [vmem:[%s10] sm:$0xf]
  %v257 = vld [vmem:[%s10 + $0x4] sm:$0xf]
  %v258 = vld [vmem:[%s10 + $0x8] sm:$0xf]
  %v259 = vld [vmem:[%s10 + $0xc] sm:$0xf]
  %v260 = vld [vmem:[%s11] sm:$0x1]
  %v262 = vlaneseq
  %v263 = vshrl.u32 %v262, 7
  %v264 = vsub.s32 0, %v263
  %v265 = vrot.slane %v260, %v264
  %v271 = vunpack.c.l.b16 %v256
  %v272 = vunpack.c.l.b16 %v257
  %v273 = vunpack.c.l.b16 %v258
  %v274 = vunpack.c.l.b16 %v259
  %v275 = vpack.c.b16 %v272, %v271
  %v276 = vpack.c.b16 %v274, %v273
  %279 = vmatprep.subr.bf16.mxu0 0
  %280 = vmatpush1.bf16.msra.mxu0 %v275
  %281 = vmatprep.subr.bf16.mxu0 0
  %282 = vmatpush1.bf16.msra.mxu0 %v276
  %283 = vmatprep.subr.bf16.mxu0 0
  %284 = vmatpush1.bf16.msra.mxu0 0
  %285 = vmatprep.subr.bf16.mxu0 0
  %286 = vmatpush1.bf16.msra.mxu0 0
  %287 = vmatprep.subr.bf16.mxu0 0
  %288 = vmatpush1.bf16.msra.mxu0 0
  %289 = vmatprep.subr.bf16.mxu0 0
  %290 = vmatpush1.bf16.msra.mxu0 0
  %291 = vmatprep.subr.bf16.mxu0 0
  %292 = vmatpush1.bf16.msra.mxu0 0
  %293 = vmatprep.subr.bf16.mxu0 0
  %294 = vmatpush1.bf16.msra.mxu0 0
  %295 = vmatprep.subr.bf16.mxu0 0
  %296 = vmatpush1.bf16.msra.mxu0 0
  %297 = vmatprep.subr.bf16.mxu0 0
  %298 = vmatpush1.bf16.msra.mxu0 0
  %299 = vmatprep.subr.bf16.mxu0 0
  %300 = vmatpush1.bf16.msra.mxu0 0
  %301 = vmatprep.subr.bf16.mxu0 0
  %302 = vmatpush1.bf16.msra.mxu0 0
  %303 = vmatprep.subr.bf16.mxu0 0
  %304 = vmatpush1.bf16.msra.mxu0 0
  %305 = vmatprep.subr.bf16.mxu0 0
  %306 = vmatpush1.bf16.msra.mxu0 0
  %307 = vmatprep.subr.bf16.mxu0 0
  %308 = vmatpush1.bf16.msra.mxu0 0
  %309 = vmatprep.subr.bf16.mxu0 0
  %310 = vmatpush1.bf16.msra.mxu0 0
  %311 = vmatprep.mubr.bf16.mxu0 0
  %312 = vmatmul.mubr.bf16.gmra.mrb[0].mxu0 %v146
  %v313 = vpop.f32.mrb[0].mxu0
  %v314 = vadd.f32 %v265, %v313
  %v315 = vpop.f32.mrb[0].mxu0
  %v316 = vpop.f32.mrb[0].mxu0
  %v317 = vpop.f32.mrb[0].mxu0
  %318 = vdwg.mxu0
  %v319 = vpack.c.bf16 %v314, %v314
  %320 = vst.msk [vmem:[%s15] sm:$0xf] %vm189, %v319
  // Predicated region
  $region50: #{gpool_forward.5} parent=0 // pred_check
    _
  $region51: #{gpool_forward.5} parent=0 // pred_check_branch
    %322 = sbr.rel (0) target = $region53
  $region52: #{gpool_forward.5} parent=0 // pred_region
    _
  $region53: #{gpool_forward.5} parent=0 // pred_fallthru
    _
  // Predicated region
  $region54: #{gpool_forward.5} parent=0 // pred_check
    _
  $region55: #{gpool_forward.5} parent=0 // pred_check_branch
    %324 = sbr.rel (0) target = $region57
  $region56: #{gpool_forward.5} parent=0 // pred_region
    _
  $region57: #{gpool_forward.5} parent=0 // pred_fallthru
    _
  // Predicated region
  $region58: #{gpool_forward.5} parent=0 // pred_check
    _
  $region59: #{gpool_forward.5} parent=0 // pred_check_branch
    %326 = sbr.rel (0) target = $region61
  $region60: #{gpool_forward.5} parent=0 // pred_region
    _
  $region61: #{gpool_forward.5} parent=0 // pred_fallthru
    _
  // Predicated region
  $region62: #{gpool_forward.5} parent=0 // pred_check
    _
  $region63: #{gpool_forward.5} parent=0 // pred_check_branch
    %328 = sbr.rel (0) target = $region65
  $region64: #{gpool_forward.5} parent=0 // pred_region
    _
  $region65: #{gpool_forward.5} parent=0 // pred_fallthru
    _
  // Predicated region
  $region66: #{gpool_forward.5} parent=0 // pred_check
    _
  $region67: #{gpool_forward.5} parent=0 // pred_check_branch
    %330 = sbr.rel (0) target = $region69
  $region68: #{gpool_forward.5} parent=0 // pred_region
    _
  $region69: #{gpool_forward.5} parent=0 // pred_fallthru
    _
  // Predicated region
  $region70: #{gpool_forward.5} parent=0 // pred_check
    _
  $region71: #{gpool_forward.5} parent=0 // pred_check_branch
    %332 = sbr.rel (0) target = $region73
  $region72: #{gpool_forward.5} parent=0 // pred_region
    _
  $region73: #{gpool_forward.5} parent=0 // pred_fallthru
    _
  // Predicated region
  $region74: #{gpool_forward.5} parent=0 // pred_check
    _
  $region75: #{gpool_forward.5} parent=0 // pred_check_branch
    %334 = sbr.rel (0) target = $region77
  $region76: #{gpool_forward.5} parent=0 // pred_region
    _
  $region77: #{gpool_forward.5} parent=0 // pred_fallthru
    _
  // Predicated region
  $region78: #{gpool_forward.5} parent=0 // pred_check
    _
  $region79: #{gpool_forward.5} parent=0 // pred_check_branch
    %336 = sbr.rel (0) target = $region81
  $region80: #{gpool_forward.5} parent=0 // pred_region
    _
  $region81: #{gpool_forward.5} parent=0 // pred_fallthru
    _

// kernel: gpool_forward.6
$region0: #{gpool_forward.6}
  #allocation0 [shape = 'u32[]', space=smem, size = 0x4, offset = 0x4, fixed_abs, tag = 'smem constant byte address 0x4 - core index']
  #allocation1 [shape = 'u32[144,128]{1,0:T(1,128)}', space=vmem, size = 0x12000, scoped, tag = 'internal scratch']
  %s0 = inlined_call_operand.vmem [shape: bf16[2,4,4,8], index: 0, kind: input, shape index: {}]
  %s1 = inlined_call_operand.vmem [shape: bf16[2,4,4,8], index: 1, kind: input, shape index: {}]
  %s2 = inlined_call_operand.vmem [shape: bf16[2,4,4,8], index: 2, kind: input, shape index: {}]
  %s3 = inlined_call_operand.vmem [shape: bf16[2,4,4,8], index: 3, kind: output, shape index: {}]
  %s4 = sld [smem:[#allocation0]]
  $region45: #{gpool_forward.6} parent=0
    _
  %s6 = ssub.s32 1, %s4
  %s7 = scalar_select 0, %s6, %s4
  loop: start=0, step=1, limit=10
  $region2: #{gpool_forward.6} parent=0 // loop_pre_header
    _
  $region3: #{gpool_forward.6} parent=0 // loop_header
    %s9 = sphi 0, %s13
    %p10 = scmp.ge.s32.totalorder %s9, 10
    %s16 = sphi 0, %s28
    %s17 = sphi 0, %s24
    %s18 = sphi 0, %s16
    %s19 = sphi 0, %s17
    %s20 = sphi 0, %s18
    %s21 = sphi 0, %s19
    %s33 = sphi 0, %s35
    %s36 = sphi 0, %s33
    %s37 = sphi 0, %s36
    %s53 = sphi 0, %s37
    %s61 = sphi 0, %s63
    %s64 = sphi 0, %s61
    %s65 = sphi 0, %s64
    %s81 = sphi 0, %s65
    %s89 = sphi 0, %s91
    %s92 = sphi 0, %s89
    %s93 = sphi 0, %s92
    %s109 = sphi 0, %s93
    %s117 = sphi 0, %s119
    %s120 = sphi 0, %s117
    %s121 = sphi 0, %s120
    %s137 = sphi 0, %s121
  $region4: #{gpool_forward.6} parent=0 // loop_header_branch
    %12 = sbr.rel (%p10) target = $region8
  $region5: #{gpool_forward.6} parent=0 // loop_body
    %s14 = ssub.s32 %s9, 1
    %s15 = ssub.s32 %s9, 2
    %s22 = sadd.s32 1, %s17
    %p23 = scmp.ge.s32.totalorder %s22, 4
    %s24 = scalar_select %p23, 0, %s22
    %s25 = sadd.s32 1, %s16
    %s26 = scalar_select %p23, %s25, %s16
    %p27 = scmp.ge.s32.totalorder %s26, 2
    %s28 = scalar_select %p27, 0, %s26
    %s29 = ssub.s32 %s16, %s28
    %s30 = ssub.s32 %s17, %s24
    %s31 = sor.u32 %s29, %s30
    %p32 = scmp.eq.s32.totalorder %s31, 0
    %s34 = sadd.s32 %s33, 1
    %s35 = scalar_select %p32, %s33, %s34
    %p38 = pneg %p32
    %p39 = scmp.eq.s32.totalorder %s9, 7
    %p40 = por %p38, %p39
    %p41 = scmp.ne.s32.totalorder %s33, %s36
    %p42 = scmp.eq.s32.totalorder %s9, 0
    %p43 = por %p41, %p42
    %p44 = scmp.ne.s32.totalorder %s33, %s36
    %p45 = scmp.eq.s32.totalorder %s14, 7
    %p46 = por %p44, %p45
    %p47 = scmp.ne.s32.totalorder %s36, %s37
    %p48 = scmp.eq.s32.totalorder %s14, 0
    %p49 = por %p47, %p48
    %p50 = scmp.ne.s32.totalorder %s36, %s37
    %p51 = scmp.eq.s32.totalorder %s15, 7
    %p52 = por %p50, %p51
    %p54 = scmp.ne.s32.totalorder %s37, %s53
    %p55 = scmp.eq.s32.totalorder %s15, 0
    %p56 = por %p54, %p55
    %s57 = ssub.s32 %s16, %s28
    %s58 = ssub.s32 %s17, %s24
    %s59 = sor.u32 %s57, %s58
    %p60 = scmp.eq.s32.totalorder %s59, 0
    %s62 = sadd.s32 %s61, 1
    %s63 = scalar_select %p60, %s61, %s62
    %p66 = pneg %p60
    %p67 = scmp.eq.s32.totalorder %s9, 7
    %p68 = por %p66, %p67
    %p69 = scmp.ne.s32.totalorder %s61, %s64
    %p70 = scmp.eq.s32.totalorder %s9, 0
    %p71 = por %p69, %p70
    %p72 = scmp.ne.s32.totalorder %s61, %s64
    %p73 = scmp.eq.s32.totalorder %s14, 7
    %p74 = por %p72, %p73
    %p75 = scmp.ne.s32.totalorder %s64, %s65
    %p76 = scmp.eq.s32.totalorder %s14, 0
    %p77 = por %p75, %p76
    %p78 = scmp.ne.s32.totalorder %s64, %s65
    %p79 = scmp.eq.s32.totalorder %s15, 7
    %p80 = por %p78, %p79
    %p82 = scmp.ne.s32.totalorder %s65, %s81
    %p83 = scmp.eq.s32.totalorder %s15, 0
    %p84 = por %p82, %p83
    %s85 = ssub.s32 %s16, %s28
    %s86 = ssub.s32 %s17, %s24
    %s87 = sor.u32 %s85, %s86
    %p88 = scmp.eq.s32.totalorder %s87, 0
    %s90 = sadd.s32 %s89, 1
    %s91 = scalar_select %p88, %s89, %s90
    %p94 = pneg %p88
    %p95 = scmp.eq.s32.totalorder %s9, 7
    %p96 = por %p94, %p95
    %p97 = scmp.ne.s32.totalorder %s89, %s92
    %p98 = scmp.eq.s32.totalorder %s9, 0
    %p99 = por %p97, %p98
    %p100 = scmp.ne.s32.totalorder %s89, %s92
    %p101 = scmp.eq.s32.totalorder %s14, 7
    %p102 = por %p100, %p101
    %p103 = scmp.ne.s32.totalorder %s92, %s93
    %p104 = scmp.eq.s32.totalorder %s14, 0
    %p105 = por %p103, %p104
    %p106 = scmp.ne.s32.totalorder %s92, %s93
    %p107 = scmp.eq.s32.totalorder %s15, 7
    %p108 = por %p106, %p107
    %p110 = scmp.ne.s32.totalorder %s93, %s109
    %p111 = scmp.eq.s32.totalorder %s15, 0
    %p112 = por %p110, %p111
    %s113 = ssub.s32 %s16, %s28
    %s114 = ssub.s32 %s17, %s24
    %s115 = sor.u32 %s113, %s114
    %p116 = scmp.eq.s32.totalorder %s115, 0
    %s118 = sadd.s32 %s117, 1
    %s119 = scalar_select %p116, %s117, %s118
    %p122 = pneg %p116
    %p123 = scmp.eq.s32.totalorder %s9, 7
    %p124 = por %p122, %p123
    %p125 = scmp.ne.s32.totalorder %s117, %s120
    %p126 = scmp.eq.s32.totalorder %s9, 0
    %p127 = por %p125, %p126
    %p128 = scmp.ne.s32.totalorder %s117, %s120
    %p129 = scmp.eq.s32.totalorder %s14, 7
    %p130 = por %p128, %p129
    %p131 = scmp.ne.s32.totalorder %s120, %s121
    %p132 = scmp.eq.s32.totalorder %s14, 0
    %p133 = por %p131, %p132
    %p134 = scmp.ne.s32.totalorder %s120, %s121
    %p135 = scmp.eq.s32.totalorder %s15, 7
    %p136 = por %p134, %p135
    %p138 = scmp.ne.s32.totalorder %s121, %s137
    %p139 = scmp.eq.s32.totalorder %s15, 0
    %p140 = por %p138, %p139
    %p141 = scmp.le.s32.totalorder 1, %s9
    %p142 = scmp.lt.s32.totalorder %s9, 9
    %p143 = pnand %p141, %p142
    %p144 = pneg %p143
    // Predicated region
    $region9: #{gpool_forward.6} parent=5 // pred_check
      _
    $region10: #{gpool_forward.6} parent=5 // pred_check_branch
      %146 = sbr.rel (%p143) target = $region12
    $region11: #{gpool_forward.6} parent=5 // pred_region
      %s147 = ssub.s32 %s9, 1
    $region12: #{gpool_forward.6} parent=5 // pred_fallthru
      _
    %p148 = scmp.lt.s32.totalorder %s9, 8
    // Predicated region
    $region13: #{gpool_forward.6} parent=5 // pred_check
      %p149 = pneg %p148
    $region14: #{gpool_forward.6} parent=5 // pred_check_branch
      %151 = sbr.rel (%p149) target = $region16
    $region15: #{gpool_forward.6} parent=5 // pred_region
      // Predicated region
      $region17: #{gpool_forward.6} parent=15 // pred_check
        %p152 = pneg %p43
      $region18: #{gpool_forward.6} parent=15 // pred_check_branch
        %154 = sbr.rel (%p152) target = $region20
      $region19: #{gpool_forward.6} parent=15 // pred_region
        %p155 = scmp.lt.s32.totalorder %s16, 1
        %s156 = scalar_select %p155, %s16, 1
        %p157 = scmp.lt.s32.totalorder %s17, 3
        %s158 = scalar_select %p157, %s17, 3
        %s159 = smul.addr %s156, 4
        %s160 = sadd.s32 %s158, %s159
        %s161 = smul.addr %s160, 2
        %s162 = scalar_lea.vmem %s0, %s161
      $region20: #{gpool_forward.6} parent=15 // pred_fallthru
        _
      // Predicated region
      $region21: #{gpool_forward.6} parent=15 // pred_check
        %p163 = pneg %p71
      $region22: #{gpool_forward.6} parent=15 // pred_check_branch
        %165 = sbr.rel (%p163) target = $region24
      $region23: #{gpool_forward.6} parent=15 // pred_region
        %p166 = scmp.lt.s32.totalorder %s16, 1
        %s167 = scalar_select %p166, %s16, 1
        %p168 = scmp.lt.s32.totalorder %s17, 3
        %s169 = scalar_select %p168, %s17, 3
        %s170 = smul.addr %s167, 4
        %s171 = sadd.s32 %s169, %s170
        %s172 = smul.addr %s171, 2
        %s173 = scalar_lea.vmem %s1, %s172
      $region24: #{gpool_forward.6} parent=15 // pred_fallthru
        _
      // Predicated region
      $region25: #{gpool_forward.6} parent=15 // pred_check
        %p174 = pneg %p99
      $region26: #{gpool_forward.6} parent=15 // pred_check_branch
        %176 = sbr.rel (%p174) target = $region28
      $region27: #{gpool_forward.6} parent=15 // pred_region
        %p177 = scmp.lt.s32.totalorder %s16, 1
        %s178 = scalar_select %p177, %s16, 1
        %p179 = scmp.lt.s32.totalorder %s17, 3
        %s180 = scalar_select %p179, %s17, 3
        %s181 = smul.addr %s178, 4
        %s182 = sadd.s32 %s180, %s181
        %s183 = smul.addr %s182, 2
        %s184 = scalar_lea.vmem %s2, %s183
      $region28: #{gpool_forward.6} parent=15 // pred_fallthru
        _
    $region16: #{gpool_forward.6} parent=5 // pred_fallthru
      _
    %p185 = scmp.le.s32.totalorder 1, %s9
    %p186 = scmp.lt.s32.totalorder %s9, 9
    %p187 = pnand %p185, %p186
    %p188 = pneg %p187
    // Predicated region
    $region29: #{gpool_forward.6} parent=5 // pred_check
      _
    $region30: #{gpool_forward.6} parent=5 // pred_check_branch
      %190 = sbr.rel (%p187) target = $region32
    $region31: #{gpool_forward.6} parent=5 // pred_region
      %s191 = ssub.s32 %s9, 1
      %p192 = scmp.lt.s32.totalorder %s18, 1
      %s193 = scalar_select %p192, %s18, 1
      %p194 = scmp.lt.s32.totalorder %s19, 3
      %s195 = scalar_select %p194, %s19, 3
      %s196 = smul.addr %s193, 4
      %s197 = sadd.s32 %s195, %s196
      %s198 = smul.addr %s197, 2
      %s199 = scalar_lea.vmem %s0, %s198
      %p200 = pneg %p49
      %p201 = pneg %p46
      %p202 = scmp.lt.s32.totalorder %s18, 1
      %s203 = scalar_select %p202, %s18, 1
      %p204 = scmp.lt.s32.totalorder %s19, 3
      %s205 = scalar_select %p204, %s19, 3
      %s206 = smul.addr %s203, 4
      %s207 = sadd.s32 %s205, %s206
      %s208 = smul.addr %s207, 2
      %s209 = scalar_lea.vmem %s1, %s208
      %p210 = pneg %p77
      %p211 = pneg %p74
      %p212 = scmp.lt.s32.totalorder %s18, 1
      %s213 = scalar_select %p212, %s18, 1
      %p214 = scmp.lt.s32.totalorder %s19, 3
      %s215 = scalar_select %p214, %s19, 3
      %s216 = smul.addr %s213, 4
      %s217 = sadd.s32 %s215, %s216
      %s218 = smul.addr %s217, 2
      %s219 = scalar_lea.vmem %s2, %s218
      %p220 = pneg %p105
      %p221 = pneg %p102
      %p222 = pneg %p133
      %p223 = pneg %p130
      %p224 = scmp.lt.s32.totalorder %s18, 1
      %s225 = scalar_select %p224, %s18, 1
      %p226 = scmp.lt.s32.totalorder %s19, 3
      %s227 = scalar_select %p226, %s19, 3
      %s228 = smul.addr %s225, 4
      %s229 = sadd.s32 %s227, %s228
      %s230 = smul.addr %s229, 2
      %s231 = scalar_lea.vmem %s3, %s230
      %p232 = scmp.lt.s32.totalorder %s18, 1
      %s233 = scalar_select %p232, %s18, 1
      %p234 = scmp.lt.s32.totalorder %s19, 3
      %s235 = scalar_select %p234, %s19, 3
      %s236 = smul.addr %s233, 4
      %s237 = sadd.s32 %s235, %s236
      %s238 = smul.addr %s237, 2
      %s239 = scalar_lea.vmem %s0, %s238
      %p240 = scmp.lt.s32.totalorder %s18, 1
      %s241 = scalar_select %p240, %s18, 1
      %p242 = scmp.lt.s32.totalorder %s19, 3
      %s243 = scalar_select %p242, %s19, 3
      %s244 = smul.addr %s241, 4
      %s245 = sadd.s32 %s243, %s244
      %s246 = smul.addr %s245, 2
      %s247 = scalar_lea.vmem %s1, %s246
      %p248 = scmp.lt.s32.totalorder %s18, 1
      %s249 = scalar_select %p248, %s18, 1
      %p250 = scmp.lt.s32.totalorder %s19, 3
      %s251 = scalar_select %p250, %s19, 3
      %s252 = smul.addr %s249, 4
      %s253 = sadd.s32 %s251, %s252
      %s254 = smul.addr %s253, 2
      %s255 = scalar_lea.vmem %s2, %s254
      %p256 = scmp.lt.s32.totalorder %s18, 1
      %s257 = scalar_select %p256, %s18, 1
      %p258 = scmp.lt.s32.totalorder %s19, 3
      %s259 = scalar_select %p258, %s19, 3
      %s260 = smul.addr %s257, 4
      %s261 = sadd.s32 %s259, %s260
      %s262 = smul.addr %s261, 2
      %s263 = scalar_lea.vmem %s3, %s262
      %v265 = vld [vmem:[%s239] sm:$0x3]
      %v266 = vld [vmem:[%s247] sm:$0x3]
      %v267 = vld [vmem:[%s255] sm:$0x3]
      %vm268 = vcmask 64512
      %v270 = vsel %vm268, %v265, 0
      %v273 = vsel %vm268, %v266, 0
      %275 = vmatprep.subr.bf16.mxu0 0
      %276 = vmatpush1.bf16.xpose.msra.mxu0 %v273
      %277 = vmatprep.subr.bf16.mxu0 0
      %278 = vmatpush1.bf16.xpose.msra.mxu0 0
      %279 = vmatprep.subr.bf16.mxu0 0
      %280 = vmatpush1.bf16.xpose.msra.mxu0 0
      %281 = vmatprep.subr.bf16.mxu0 0
      %282 = vmatpush1.bf16.xpose.msra.mxu0 0
      %283 = vmatprep.subr.bf16.mxu0 0
      %284 = vmatpush1.bf16.xpose.msra.mxu0 0
      %285 = vmatprep.subr.bf16.mxu0 0
      %286 = vmatpush1.bf16.xpose.msra.mxu0 0
      %287 = vmatprep.subr.bf16.mxu0 0
      %288 = vmatpush1.bf16.xpose.msra.mxu0 0
      %289 = vmatprep.subr.bf16.mxu0 0
      %290 = vmatpush1.bf16.xpose.msra.mxu0 0
      %291 = vmatprep.subr.bf16.mxu0 0
      %292 = vmatpush1.bf16.xpose.msra.mxu0 0
      %293 = vmatprep.subr.bf16.mxu0 0
      %294 = vmatpush1.bf16.xpose.msra.mxu0 0
      %295 = vmatprep.subr.bf16.mxu0 0
      %296 = vmatpush1.bf16.xpose.msra.mxu0 0
      %297 = vmatprep.subr.bf16.mxu0 0
      %298 = vmatpush1.bf16.xpose.msra.mxu0 0
      %299 = vmatprep.subr.bf16.mxu0 0
      %300 = vmatpush1.bf16.xpose.msra.mxu0 0
      %301 = vmatprep.subr.bf16.mxu0 0
      %302 = vmatpush1.bf16.xpose.msra.mxu0 0
      %303 = vmatprep.subr.bf16.mxu0 0
      %304 = vmatpush1.bf16.xpose.msra.mxu0 0
      %305 = vmatprep.subr.bf16.mxu0 0
      %306 = vmatpush1.bf16.xpose.msra.mxu0 0
      %307 = vmatprep.mubr.bf16.mxu0 0
      %308 = vmatmul.mubr.bf16.gmra.mrb[0].mxu0 %v270
      %v309 = vpop.f32.mrb[0].mxu0
      %v310 = vadd.f32 0.0, %v309
      %v311 = vpop.f32.mrb[0].mxu0
      %v312 = vpop.f32.mrb[0].mxu0
      %v313 = vpop.f32.mrb[0].mxu0
      %314 = vdwg.mxu0
      %v315 = vmul.f32 %v310, 0.35355338
      %vm316 = vcmask 27648
      %v317 = vsel %vm316, %v315, -inf
      %318 = vmax.xlane.f32.xlu0 %v317
      %v319 = vpop.xlane.xlu0 %318
      %v320 = vsub.f32 %v315, %v319
      %v321 = vmul.f32 %v320, 1.442695
      %v322 = vpow.pop %v321
      %v323 = vsel %vm316, %v322, 0.0
      %324 = vadd.xlane.f32.xlu0 %v323
      %v325 = vpop.xlane.xlu0 %324
      %v326 = vrcp.pop %v325
      %v327 = vmul.f32 %v322, %v326
      %v328 = vpack.c.bf16 %v327, %v327
      %vm329 = vcmask 31744
      %v331 = vsel %vm329, %v328, 0
      %vm333 = vcmask 1041408
      %v335 = vsel %vm333, %v267, 0
      %337 = vmatprep.subr.bf16.mxu0 0
      %338 = vmatpush1.bf16.msra.mxu0 %v335
      %339 = vmatprep.subr.bf16.mxu0 0
      %340 = vmatpush1.bf16.msra.mxu0 0
      %341 = vmatprep.subr.bf16.mxu0 0
      %342 = vmatpush1.bf16.msra.mxu0 0
      %343 = vmatprep.subr.bf16.mxu0 0
      %344 = vmatpush1.bf16.msra.mxu0 0
      %345 = vmatprep.subr.bf16.mxu0 0
      %346 = vmatpush1.bf16.msra.mxu0 0
      %347 = vmatprep.subr.bf16.mxu0 0
      %348 = vmatpush1.bf16.msra.mxu0 0
      %349 = vmatprep.subr.bf16.mxu0 0
      %350 = vmatpush1.bf16.msra.mxu0 0
      %351 = vmatprep.subr.bf16.mxu0 0
      %352 = vmatpush1.bf16.msra.mxu0 0
      %353 = vmatprep.subr.bf16.mxu0 0
      %354 = vmatpush1.bf16.msra.mxu0 0
      %355 = vmatprep.subr.bf16.mxu0 0
      %356 = vmatpush1.bf16.msra.mxu0 0
      %357 = vmatprep.subr.bf16.mxu0 0
      %358 = vmatpush1.bf16.msra.mxu0 0
      %359 = vmatprep.subr.bf16.mxu0 0
      %360 = vmatpush1.bf16.msra.mxu0 0
      %361 = vmatprep.subr.bf16.mxu0 0
      %362 = vmatpush1.bf16.msra.mxu0 0
      %363 = vmatprep.subr.bf16.mxu0 0
      %364 = vmatpush1.bf16.msra.mxu0 0
      %365 = vmatprep.subr.bf16.mxu0 0
      %366 = vmatpush1.bf16.msra.mxu0 0
      %367 = vmatprep.subr.bf16.mxu0 0
      %368 = vmatpush1.bf16.msra.mxu0 0
      %369 = vmatprep.mubr.bf16.mxu0 0
      %370 = vmatmul.mubr.bf16.gmra.mrb[0].mxu0 %v331
      %v371 = vpop.f32.mrb[0].mxu0
      %v372 = vadd.f32 0.0, %v371
      %v373 = vpop.f32.mrb[0].mxu0
      %v374 = vpop.f32.mrb[0].mxu0
      %v375 = vpop.f32.mrb[0].mxu0
      %376 = vdwg.mxu0
      %v377 = vpack.c.bf16 %v372, %v372
      %vm378 = vcmask 58368
      %379 = vst.msk [vmem:[%s263] sm:$0x3] %vm378, %v377
      %p380 = scmp.lt.s32.totalorder %s18, 1
      %s381 = scalar_select %p380, %s18, 1
      %p382 = scmp.lt.s32.totalorder %s19, 3
      %s383 = scalar_select %p382, %s19, 3
      %s384 = smul.addr %s381, 4
      %s385 = sadd.s32 %s383, %s384
      %s386 = smul.addr %s385, 2
      %s387 = scalar_lea.vmem %s3, %s386
      // Predicated region
      $region33: #{gpool_forward.6} parent=31 // pred_check
        %p388 = pneg %p130
      $region34: #{gpool_forward.6} parent=31 // pred_check_branch
        %390 = sbr.rel (%p388) target = $region36
      $region35: #{gpool_forward.6} parent=31 // pred_region
        _
      $region36: #{gpool_forward.6} parent=31 // pred_fallthru
        _
    $region32: #{gpool_forward.6} parent=5 // pred_fallthru
      _
    %p391 = scmp.le.s32.totalorder 2, %s9
    // Predicated region
    $region37: #{gpool_forward.6} parent=5 // pred_check
      %p392 = pneg %p391
    $region38: #{gpool_forward.6} parent=5 // pred_check_branch
      %394 = sbr.rel (%p392) target = $region40
    $region39: #{gpool_forward.6} parent=5 // pred_region
      %s395 = ssub.s32 %s9, 2
      // Predicated region
      $region41: #{gpool_forward.6} parent=39 // pred_check
        %p396 = pneg %p136
      $region42: #{gpool_forward.6} parent=39 // pred_check_branch
        %398 = sbr.rel (%p396) target = $region44
      $region43: #{gpool_forward.6} parent=39 // pred_region
        %p399 = scmp.lt.s32.totalorder %s20, 1
        %s400 = scalar_select %p399, %s20, 1
        %p401 = scmp.lt.s32.totalorder %s21, 3
        %s402 = scalar_select %p401, %s21, 3
        %s403 = smul.addr %s400, 4
        %s404 = sadd.s32 %s402, %s403
        %s405 = smul.addr %s404, 2
        %s406 = scalar_lea.vmem %s3, %s405
      $region44: #{gpool_forward.6} parent=39 // pred_fallthru
        _
    $region40: #{gpool_forward.6} parent=5 // pred_fallthru
      _
  $region6: #{gpool_forward.6} parent=0 // loop_footer
    %s13 = sadd.s32 1, %s9
  $region7: #{gpool_forward.6} parent=0 // loop_footer_branch
    %8 = sbr.rel target = $region3
  $region8: #{gpool_forward.6} parent=0 // loop_exit
    _

// kernel: gpool_forward.7
$region0: #{gpool_forward.7}
  #allocation0 [shape = 'u32[]', space=smem, size = 0x4, offset = 0x4, fixed_abs, tag = 'smem constant byte address 0x4 - core index']
  #allocation1 [shape = 'u32[144,128]{1,0:T(1,128)}', space=vmem, size = 0x12000, scoped, tag = 'internal scratch']
  %s0 = inlined_call_operand.vmem [shape: bf16[8,32], index: 0, kind: input, shape index: {}]
  %s1 = inlined_call_operand.vmem [shape: f32[8,32], index: 1, kind: input, shape index: {}]
  %s2 = inlined_call_operand.vmem [shape: bf16[32,32], index: 2, kind: input, shape index: {}]
  %s3 = inlined_call_operand.vmem [shape: f32[1,32], index: 3, kind: input, shape index: {}]
  %s4 = inlined_call_operand.vmem [shape: f32[1,32], index: 4, kind: input, shape index: {}]
  %s5 = inlined_call_operand.vmem [shape: f32[1,32], index: 5, kind: input, shape index: {}]
  %s6 = inlined_call_operand.vmem [shape: bf16[32,64], index: 6, kind: input, shape index: {}]
  %s7 = inlined_call_operand.vmem [shape: f32[1,64], index: 7, kind: input, shape index: {}]
  %s8 = inlined_call_operand.vmem [shape: bf16[64,32], index: 8, kind: input, shape index: {}]
  %s9 = inlined_call_operand.vmem [shape: f32[1,32], index: 9, kind: input, shape index: {}]
  %s10 = inlined_call_operand.hbm [shape: f32[8,32], index: 10, kind: output, shape index: {}]
  %s11 = sld [smem:[#allocation0]]
  $region50: #{gpool_forward.7} parent=0
    _
  %s13 = ssub.s32 1, %s11
  %s14 = scalar_select 0, %s13, %s11
  $region1: #{gpool_forward.7} parent=0
    #allocation2 [shape = 'u8[4096]{0}', space=vmem, size = 0x1000, scoped, tag = 'output window, operand 0, single buffered']
    #allocation3 [shape = 's32[1]{0}', space=sflag, size = 0x4, scoped, tag = 'scoped memory for gpool_forward.7']
    %15 = vsyncpa [#allocation3], 0
    // Predicated region
    $region2: #{gpool_forward.7} parent=1 // pred_check
      _
    $region3: #{gpool_forward.7} parent=1 // pred_check_branch
      %17 = sbr.rel (0) target = $region5
    $region4: #{gpool_forward.7} parent=1 // pred_region
      _
    $region5: #{gpool_forward.7} parent=1 // pred_fallthru
      _
    // Predicated region
    $region6: #{gpool_forward.7} parent=1 // pred_check
      _
    $region7: #{gpool_forward.7} parent=1 // pred_check_branch
      %19 = sbr.rel (0) target = $region9
    $region8: #{gpool_forward.7} parent=1 // pred_region
      _
    $region9: #{gpool_forward.7} parent=1 // pred_fallthru
      _
    // Predicated region
    $region10: #{gpool_forward.7} parent=1 // pred_check
      _
    $region11: #{gpool_forward.7} parent=1 // pred_check_branch
      %21 = sbr.rel (0) target = $region13
    $region12: #{gpool_forward.7} parent=1 // pred_region
      _
    $region13: #{gpool_forward.7} parent=1 // pred_fallthru
      _
    // Predicated region
    $region14: #{gpool_forward.7} parent=1 // pred_check
      _
    $region15: #{gpool_forward.7} parent=1 // pred_check_branch
      %23 = sbr.rel (0) target = $region17
    $region16: #{gpool_forward.7} parent=1 // pred_region
      _
    $region17: #{gpool_forward.7} parent=1 // pred_fallthru
      _
    // Predicated region
    $region18: #{gpool_forward.7} parent=1 // pred_check
      _
    $region19: #{gpool_forward.7} parent=1 // pred_check_branch
      %25 = sbr.rel (0) target = $region21
    $region20: #{gpool_forward.7} parent=1 // pred_region
      _
    $region21: #{gpool_forward.7} parent=1 // pred_fallthru
      _
    // Predicated region
    $region22: #{gpool_forward.7} parent=1 // pred_check
      _
    $region23: #{gpool_forward.7} parent=1 // pred_check_branch
      %27 = sbr.rel (0) target = $region25
    $region24: #{gpool_forward.7} parent=1 // pred_region
      _
    $region25: #{gpool_forward.7} parent=1 // pred_fallthru
      _
    // Predicated region
    $region26: #{gpool_forward.7} parent=1 // pred_check
      _
    $region27: #{gpool_forward.7} parent=1 // pred_check_branch
      %29 = sbr.rel (0) target = $region29
    $region28: #{gpool_forward.7} parent=1 // pred_region
      _
    $region29: #{gpool_forward.7} parent=1 // pred_fallthru
      _
    // Predicated region
    $region30: #{gpool_forward.7} parent=1 // pred_check
      _
    $region31: #{gpool_forward.7} parent=1 // pred_check_branch
      %31 = sbr.rel (0) target = $region33
    $region32: #{gpool_forward.7} parent=1 // pred_region
      _
    $region33: #{gpool_forward.7} parent=1 // pred_fallthru
      _
    // Predicated region
    $region34: #{gpool_forward.7} parent=1 // pred_check
      _
    $region35: #{gpool_forward.7} parent=1 // pred_check_branch
      %33 = sbr.rel (0) target = $region37
    $region36: #{gpool_forward.7} parent=1 // pred_region
      _
    $region37: #{gpool_forward.7} parent=1 // pred_fallthru
      _
    // Predicated region
    $region38: #{gpool_forward.7} parent=1 // pred_check
      _
    $region39: #{gpool_forward.7} parent=1 // pred_check_branch
      %35 = sbr.rel (0) target = $region41
    $region40: #{gpool_forward.7} parent=1 // pred_region
      _
    $region41: #{gpool_forward.7} parent=1 // pred_fallthru
      _
    %v37 = vld [vmem:[%s1] sm:$0xff]
    %v38 = vld [vmem:[%s0] sm:$0xf]
    %v39 = vld [vmem:[%s2] sm:$0xf]
    %v40 = vld [vmem:[%s2 + $0x4] sm:$0xf]
    %v41 = vld [vmem:[%s2 + $0x8] sm:$0xf]
    %v42 = vld [vmem:[%s2 + $0xc] sm:$0xf]
    %v43 = vld [vmem:[%s3] sm:$0x1]
    %v45 = vlaneseq
    %v46 = vshrl.u32 %v45, 7
    %v47 = vsub.s32 0, %v46
    %v48 = vrot.slane %v43, %v47
    %v54 = vunpack.c.l.b16 %v39
    %v55 = vunpack.c.l.b16 %v40
    %v56 = vunpack.c.l.b16 %v41
    %v57 = vunpack.c.l.b16 %v42
    %v58 = vpack.c.b16 %v55, %v54
    %v59 = vpack.c.b16 %v57, %v56
    %vm62 = vcmask 261120
    %v64 = vsel %vm62, %v38, 0
    %66 = vmatprep.subr.bf16.mxu0 0
    %67 = vmatpush1.bf16.msra.mxu0 %v58
    %68 = vmatprep.subr.bf16.mxu0 0
    %69 = vmatpush1.bf16.msra.mxu0 %v59
    %70 = vmatprep.subr.bf16.mxu0 0
    %71 = vmatpush1.bf16.msra.mxu0 0
    %72 = vmatprep.subr.bf16.mxu0 0
    %73 = vmatpush1.bf16.msra.mxu0 0
    %74 = vmatprep.subr.bf16.mxu0 0
    %75 = vmatpush1.bf16.msra.mxu0 0
    %76 = vmatprep.subr.bf16.mxu0 0
    %77 = vmatpush1.bf16.msra.mxu0 0
    %78 = vmatprep.subr.bf16.mxu0 0
    %79 = vmatpush1.bf16.msra.mxu0 0
    %80 = vmatprep.subr.bf16.mxu0 0
    %81 = vmatpush1.bf16.msra.mxu0 0
    %82 = vmatprep.subr.bf16.mxu0 0
    %83 = vmatpush1.bf16.msra.mxu0 0
    %84 = vmatprep.subr.bf16.mxu0 0
    %85 = vmatpush1.bf16.msra.mxu0 0
    %86 = vmatprep.subr.bf16.mxu0 0
    %87 = vmatpush1.bf16.msra.mxu0 0
    %88 = vmatprep.subr.bf16.mxu0 0
    %89 = vmatpush1.bf16.msra.mxu0 0
    %90 = vmatprep.subr.bf16.mxu0 0
    %91 = vmatpush1.bf16.msra.mxu0 0
    %92 = vmatprep.subr.bf16.mxu0 0
    %93 = vmatpush1.bf16.msra.mxu0 0
    %94 = vmatprep.subr.bf16.mxu0 0
    %95 = vmatpush1.bf16.msra.mxu0 0
    %96 = vmatprep.subr.bf16.mxu0 0
    %97 = vmatpush1.bf16.msra.mxu0 0
    %98 = vmatprep.mubr.bf16.mxu0 0
    %99 = vmatmul.mubr.bf16.gmra.mrb[0].mxu0 %v64
    %v100 = vpop.f32.mrb[0].mxu0
    %v101 = vadd.f32 %v48, %v100
    %v102 = vpop.f32.mrb[0].mxu0
    %v103 = vpop.f32.mrb[0].mxu0
    %v104 = vpop.f32.mrb[0].mxu0
    %105 = vdwg.mxu0
    %v106 = vadd.f32 %v37, %v101
    %v107 = vld [vmem:[%s4] sm:$0x1]
    %v108 = vld [vmem:[%s5] sm:$0x1]
    %v109 = vsel %vm62, %v106, 0.0
    %110 = vadd.xlane.f32.xlu0 %v109
    %v111 = vpop.xlane.xlu0 %110
    %v112 = vrcp.pop 32.0
    %v113 = vmul.f32 %v111, %v112
    %v114 = vsub.f32 %v106, %v113
    %v115 = vmul.f32 %v114, %v114
    %v116 = vsel %vm62, %v115, 0.0
    %117 = vadd.xlane.f32.xlu0 %v116
    %v118 = vpop.xlane.xlu0 %117
    %v119 = vmul.f32 %v118, %v112
    %v120 = vadd.f32 %v119, 1e-05
    %v121 = vrsqrt.pop %v120
    %v122 = vmul.f32 %v114, %v121
    %v124 = vlaneseq
    %v125 = vshrl.u32 %v124, 7
    %v126 = vsub.s32 0, %v125
    %v127 = vrot.slane %v107, %v126
    %v129 = vmul.f32 %v122, %v127
    %v131 = vlaneseq
    %v132 = vshrl.u32 %v131, 7
    %v133 = vsub.s32 0, %v132
    %v134 = vrot.slane %v108, %v133
    %v136 = vadd.f32 %v129, %v134
    %v137 = vpack.c.bf16 %v136, %v136
    %v138 = vld [vmem:[%s6] sm:$0xf]
    %v139 = vld [vmem:[%s6 + $0x4] sm:$0xf]
    %v140 = vld [vmem:[%s6 + $0x8] sm:$0xf]
    %v141 = vld [vmem:[%s6 + $0xc] sm:$0xf]
    %v142 = vld [vmem:[%s7] sm:$0x1]
    %v144 = vlaneseq
    %v145 = vshrl.u32 %v144, 7
    %v146 = vsub.s32 0, %v145
    %v147 = vrot.slane %v142, %v146
    %v153 = vunpack.c.l.b16 %v138
    %v154 = vunpack.c.l.b16 %v139
    %v155 = vunpack.c.l.b16 %v140
    %v156 = vunpack.c.l.b16 %v141
    %v157 = vpack.c.b16 %v154, %v153
    %v158 = vpack.c.b16 %v156, %v155
    %v162 = vsel %vm62, %v137, 0
    %164 = vmatprep.subr.bf16.mxu0 0
    %165 = vmatpush1.bf16.msra.mxu0 %v157
    %166 = vmatprep.subr.bf16.mxu0 0
    %167 = vmatpush1.bf16.msra.mxu0 %v158
    %168 = vmatprep.subr.bf16.mxu0 0
    %169 = vmatpush1.bf16.msra.mxu0 0
    %170 = vmatprep.subr.bf16.mxu0 0
    %171 = vmatpush1.bf16.msra.mxu0 0
    %172 = vmatprep.subr.bf16.mxu0 0
    %173 = vmatpush1.bf16.msra.mxu0 0
    %174 = vmatprep.subr.bf16.mxu0 0
    %175 = vmatpush1.bf16.msra.mxu0 0
    %176 = vmatprep.subr.bf16.mxu0 0
    %177 = vmatpush1.bf16.msra.mxu0 0
    %178 = vmatprep.subr.bf16.mxu0 0
    %179 = vmatpush1.bf16.msra.mxu0 0
    %180 = vmatprep.subr.bf16.mxu0 0
    %181 = vmatpush1.bf16.msra.mxu0 0
    %182 = vmatprep.subr.bf16.mxu0 0
    %183 = vmatpush1.bf16.msra.mxu0 0
    %184 = vmatprep.subr.bf16.mxu0 0
    %185 = vmatpush1.bf16.msra.mxu0 0
    %186 = vmatprep.subr.bf16.mxu0 0
    %187 = vmatpush1.bf16.msra.mxu0 0
    %188 = vmatprep.subr.bf16.mxu0 0
    %189 = vmatpush1.bf16.msra.mxu0 0
    %190 = vmatprep.subr.bf16.mxu0 0
    %191 = vmatpush1.bf16.msra.mxu0 0
    %192 = vmatprep.subr.bf16.mxu0 0
    %193 = vmatpush1.bf16.msra.mxu0 0
    %194 = vmatprep.subr.bf16.mxu0 0
    %195 = vmatpush1.bf16.msra.mxu0 0
    %196 = vmatprep.mubr.bf16.mxu0 0
    %197 = vmatmul.mubr.bf16.gmra.mrb[0].mxu0 %v162
    %v198 = vpop.f32.mrb[0].mxu0
    %v199 = vadd.f32 %v147, %v198
    %v200 = vpop.f32.mrb[0].mxu0
    %v201 = vpop.f32.mrb[0].mxu0
    %v202 = vpop.f32.mrb[0].mxu0
    %203 = vdwg.mxu0
    %v204 = vmax.f32 %v199, 0.0
    %v205 = vpack.c.bf16 %v204, %v204
    %v206 = vld [vmem:[%s8] sm:$0xf]
    %v207 = vld [vmem:[%s8 + $0x4] sm:$0xf]
    %v208 = vld [vmem:[%s8 + $0x8] sm:$0xf]
    %v209 = vld [vmem:[%s8 + $0xc] sm:$0xf]
    %v210 = vld [vmem:[%s8 + $0x10] sm:$0xf]
    %v211 = vld [vmem:[%s8 + $0x14] sm:$0xf]
    %v212 = vld [vmem:[%s8 + $0x18] sm:$0xf]
    %v213 = vld [vmem:[%s8 + $0x1c] sm:$0xf]
    %v214 = vld [vmem:[%s9] sm:$0x1]
    %v216 = vlaneseq
    %v217 = vshrl.u32 %v216, 7
    %v218 = vsub.s32 0, %v217
    %v219 = vrot.slane %v214, %v218
    %v229 = vunpack.c.l.b16 %v206
    %v230 = vunpack.c.l.b16 %v207
    %v231 = vunpack.c.l.b16 %v208
    %v232 = vunpack.c.l.b16 %v209
    %v233 = vunpack.c.l.b16 %v210
    %v234 = vunpack.c.l.b16 %v211
    %v235 = vunpack.c.l.b16 %v212
    %v236 = vunpack.c.l.b16 %v213
    %v237 = vpack.c.b16 %v230, %v229
    %v238 = vpack.c.b16 %v232, %v231
    %v239 = vpack.c.b16 %v234, %v233
    %v240 = vpack.c.b16 %v236, %v235
    %vm245 = vcmask 523264
    %v247 = vsel %vm245, %v205, 0
    %249 = vmatprep.subr.bf16.mxu0 0
    %250 = vmatpush1.bf16.msra.mxu0 %v237
    %251 = vmatprep.subr.bf16.mxu0 0
    %252 = vmatpush1.bf16.msra.mxu0 %v238
    %253 = vmatprep.subr.bf16.mxu0 0
    %254 = vmatpush1.bf16.msra.mxu0 %v239
    %255 = vmatprep.subr.bf16.mxu0 0
    %256 = vmatpush1.bf16.msra.mxu0 %v240
    %257 = vmatprep.subr.bf16.mxu0 0
    %258 = vmatpush1.bf16.msra.mxu0 0
    %259 = vmatprep.subr.bf16.mxu0 0
    %260 = vmatpush1.bf16.msra.mxu0 0
    %261 = vmatprep.subr.bf16.mxu0 0
    %262 = vmatpush1.bf16.msra.mxu0 0
    %263 = vmatprep.subr.bf16.mxu0 0
    %264 = vmatpush1.bf16.msra.mxu0 0
    %265 = vmatprep.subr.bf16.mxu0 0
    %266 = vmatpush1.bf16.msra.mxu0 0
    %267 = vmatprep.subr.bf16.mxu0 0
    %268 = vmatpush1.bf16.msra.mxu0 0
    %269 = vmatprep.subr.bf16.mxu0 0
    %270 = vmatpush1.bf16.msra.mxu0 0
    %271 = vmatprep.subr.bf16.mxu0 0
    %272 = vmatpush1.bf16.msra.mxu0 0
    %273 = vmatprep.subr.bf16.mxu0 0
    %274 = vmatpush1.bf16.msra.mxu0 0
    %275 = vmatprep.subr.bf16.mxu0 0
    %276 = vmatpush1.bf16.msra.mxu0 0
    %277 = vmatprep.subr.bf16.mxu0 0
    %278 = vmatpush1.bf16.msra.mxu0 0
    %279 = vmatprep.subr.bf16.mxu0 0
    %280 = vmatpush1.bf16.msra.mxu0 0
    %281 = vmatprep.mubr.bf16.mxu0 0
    %282 = vmatmul.mubr.bf16.gmra.mrb[0].mxu0 %v247
    %v283 = vpop.f32.mrb[0].mxu0
    %v284 = vadd.f32 %v219, %v283
    %v285 = vpop.f32.mrb[0].mxu0
    %v286 = vpop.f32.mrb[0].mxu0
    %v287 = vpop.f32.mrb[0].mxu0
    %288 = vdwg.mxu0
    %v289 = vadd.f32 %v106, %v284
    %290 = vst.msk [vmem:[#allocation2] sm:$0xff] %vm62, %v289
    // Predicated region
    $region42: #{gpool_forward.7} parent=1 // pred_check
      _
    $region43: #{gpool_forward.7} parent=1 // pred_check_branch
      %292 = sbr.rel (0) target = $region45
    $region44: #{gpool_forward.7} parent=1 // pred_region
      %s294 = ssub.s32 128, 128
      %295 = vsyncadd [#allocation3], %s294
      %s297 = sshll.u32 [#allocation2], 4
      %s298 = int_to_ptr.vmem [resolvable:$true] %s297
      %300 = dma.vmem_to_hbm [thread:$0]  %s298, 128, %s10, [#allocation3]
    $region45: #{gpool_forward.7} parent=1 // pred_fallthru
      _
    // Predicated region
    $region46: #{gpool_forward.7} parent=1 // pred_check
      _
    $region47: #{gpool_forward.7} parent=1 // pred_check_branch
      %302 = sbr.rel (0) target = $region49
    $region48: #{gpool_forward.7} parent=1 // pred_region
      %303 = dma.done [#allocation3], 128
    $region49: #{gpool_forward.7} parent=1 // pred_fallthru
      _
    %304 = vsyncpa [#allocation3], 1

</llo_original>
